<compile_context>
chip_gen: v5e
topology: v5e:2x2
jax: 0.10.0
libtpu: 0.0.40
codegen_flags: <defaults>
</compile_context>

<pallas_src>
import functools
import math

import jax
import jax.numpy as jnp
from jax import lax
from jax.experimental import pallas as pl
from jax.experimental.pallas import tpu as pltpu

# Eval-mode BatchNorm with Mnet init (gamma=1, beta=0, running_mean=0, running_var=1):
# BN(y) = y / sqrt(1+eps).  The scale is folded into the conv weights & bias.
# TODO(synk): generalize the fold to per-channel gamma/beta/mean/var for pretrained weights.
BN_SCALE = 1.0 / math.sqrt(1.0 + 1e-5)


def _default_vmem_limit():
    try:
        info = pltpu.get_tpu_info()
        cap = getattr(info, "vmem_capacity_bytes", None)
        if cap:
            return int(cap * 0.7)          # ~90 MiB on v5e/v6e, ~45 MiB on v7x
    except Exception:
        pass
    return 48 * 1024 * 1024


_VMEM_LIMIT = _default_vmem_limit()


def _round_up(x, m):
    return (x + m - 1) // m * m


# ---------------------------------------------------------------------------
# Pallas kernel: tiled matmul with f32 scratch accumulator + fused bias/activation
# ---------------------------------------------------------------------------
def _mm_kernel(x_ref, w_ref, b_ref, o_ref, acc_ref, *, act):
    k = pl.program_id(2)

    @pl.when(k == 0)
    def _():
        acc_ref[...] = jnp.zeros_like(acc_ref)

    acc_ref[...] += jnp.dot(x_ref[...], w_ref[...],
                            preferred_element_type=jnp.float32)

    @pl.when(k == pl.num_programs(2) - 1)
    def _():
        y = acc_ref[...] + b_ref[...]
        if act == "relu":
            y = jnp.maximum(y, 0.0)
        elif act == "sigmoid":
            y = jax.nn.sigmoid(y)
        o_ref[...] = y.astype(o_ref.dtype)


def _pick_m(m):
    for c in (512, 256, 128):
        if m % c == 0:
            return c, m
    if m <= 512:
        mp = _round_up(m, 8)
        return mp, mp
    return 128, _round_up(m, 128)


def _pick_k(k):
    for c in (1024, 512, 256, 128):
        if k % c == 0:
            return c, k
    if k <= 1024:
        kp = _round_up(k, 8)
        return kp, kp
    return 128, _round_up(k, 128)


def _pick_n(n):
    for c in (512, 256, 128):
        if n % c == 0:
            return c, n
    if n <= 512:
        return n, n
    return 128, _round_up(n, 128)


@functools.partial(jax.jit, static_argnames=("act", "scale"))
def matmul_bias_act(x, w, bias, act="none", scale=1.0):
    """act((x @ (w*scale)) + bias*scale), bf16 output; bias broadcast over rows."""
    M, K = x.shape
    _, N = w.shape
    bq = (bias * scale).astype(jnp.float32)

    # Small / skinny matmuls (CA-MLP, score heads, tiny 4x4/8x8 decoder maps): MXU tiles
    # would be mostly padding and the pallas_call launch overhead dominates -> plain XLA.
    if M <= 128 or N < 16 or K < 16:
        y = jnp.dot(x.astype(jnp.float32), (w * scale).astype(jnp.float32),
                    preferred_element_type=jnp.float32) + bq[None, :]
        if act == "relu":
            y = jnp.maximum(y, 0.0)
        elif act == "sigmoid":
            y = jax.nn.sigmoid(y)
        return y.astype(jnp.bfloat16)

    TM, Mp = _pick_m(M)
    TK, Kp = _pick_k(K)
    TN, Np = _pick_n(N)

    xq = x.astype(jnp.bfloat16)
    wq = (w * scale).astype(jnp.bfloat16)
    if Mp > M or Kp > K:
        xq = jnp.pad(xq, ((0, Mp - M), (0, Kp - K)))
    if Kp > K or Np > N:
        wq = jnp.pad(wq, ((0, Kp - K), (0, Np - N)))
    bm = bq.reshape(1, N)
    if Np > N:
        bm = jnp.pad(bm, ((0, 0), (0, Np - N)))

    out = pl.pallas_call(
        functools.partial(_mm_kernel, act=act),
        out_shape=jax.ShapeDtypeStruct((Mp, Np), jnp.bfloat16),
        grid=(Mp // TM, Np // TN, Kp // TK),
        in_specs=[
            pl.BlockSpec((TM, TK), lambda i, j, k: (i, k)),
            pl.BlockSpec((TK, TN), lambda i, j, k: (k, j)),
            pl.BlockSpec((1, TN), lambda i, j, k: (0, j)),
        ],
        out_specs=pl.BlockSpec((TM, TN), lambda i, j, k: (i, j)),
        scratch_shapes=[pltpu.VMEM((TM, TN), jnp.float32)],
        compiler_params=pltpu.CompilerParams(
            dimension_semantics=("parallel", "parallel", "arbitrary"),
            vmem_limit_bytes=_VMEM_LIMIT),
    )(xq, wq, bm)
    return out[:M, :N]


# ---------------------------------------------------------------------------
# Pallas kernel: direct stride-1 "same" convolution (no im2col materialization)
#   input  xs : (B, (H+2p)*W, kw*cin_p)  - kw horizontally-shifted copies concat on channels
#   weight wq : (kh*kw*cin_p, Cout)      - (ky, kx, cin) row order
#   Per grid block: kh bf16 dots with contraction depth kw*cin_p, accumulated in f32.
# ---------------------------------------------------------------------------
def _conv_kernel(x_ref, w_ref, b_ref, o_ref, *, kh, kcin, width, act):
    HW = o_ref.shape[1]
    TN = o_ref.shape[2]
    acc = jnp.zeros((HW, TN), jnp.float32)
    for ky in range(kh):
        patch = x_ref[0, ky * width:ky * width + HW, :]          # (HW, kw*cin_p) bf16
        acc = acc + jnp.dot(patch, w_ref[ky * kcin:(ky + 1) * kcin, :],
                            preferred_element_type=jnp.float32)
    y = acc + b_ref[...]
    if act == "relu":
        y = jnp.maximum(y, 0.0)
    elif act == "sigmoid":
        y = jax.nn.sigmoid(y)
    o_ref[0] = y.astype(o_ref.dtype)


def _conv_tn(cout):
    if cout <= 256:
        return cout
    if cout % 256 == 0:
        return 256
    return 128


def _direct_ok(B, H, W, kh, kw, cin, cout):
    if kh != kw or W % 8 != 0 or H * W < 64 or cin <= 32:
        return False
    if not (cout <= 256 or cout % 256 == 0 or cout % 128 == 0):
        return False
    cin_p = _round_up(cin, 8)
    kcin = kw * cin_p
    Hp = H + 2 * (kh // 2)
    TN = _conv_tn(cout)
    # double-buffered bf16 in/weight/out blocks + the in-kernel f32 accumulator
    blocks = 2 * (Hp * W * kcin * 2 + kh * kcin * TN * 2 + H * W * TN * 2)
    blocks += H * W * TN * 4
    # TODO(synk): add H-row halo tiling so huge maps stay on the direct path within v7x's
    # 64 MiB VMEM; for now oversized blocks fall back to the tiled im2col matmul.
    return blocks < (_VMEM_LIMIT * 3) // 4


@functools.partial(jax.jit, static_argnames=("act", "scale"))
def conv_direct(x, w, b, act="none", scale=1.0):
    kh, kw, cin, cout = w.shape
    pad = kh // 2
    B, H, W, _ = x.shape
    cin_p = _round_up(cin, 8)
    kcin = kw * cin_p
    Hp = H + 2 * pad

    xp = jnp.pad(x.astype(jnp.bfloat16),
                 ((0, 0), (pad, pad), (pad, pad), (0, cin_p - cin)))
    # kw horizontally-shifted views concatenated on channels, rows flattened so that the
    # taps of output-row r for a given ky are one contiguous, aligned row range.
    xs = jnp.concatenate([xp[:, :, kx:kx + W, :] for kx in range(kw)], axis=-1)
    xs = xs.reshape(B, Hp * W, kcin)

    wq = w * scale
    if cin_p != cin:
        wq = jnp.pad(wq, ((0, 0), (0, 0), (0, cin_p - cin), (0, 0)))
    wq = wq.reshape(kh * kcin, cout).astype(jnp.bfloat16)   # (ky, kx, cin) row order
    bq = (b * scale).reshape(1, cout).astype(jnp.float32)

    TN = _conv_tn(cout)
    nj = cout // TN

    # Grid ordering: keep the larger reused operand resident across the inner axis.
    x1_bytes = Hp * W * kcin * 2
    w_bytes = kh * kcin * cout * 2
    cost_b_outer = (B if nj > 1 else 1) * w_bytes + B * x1_bytes
    cost_j_outer = w_bytes + nj * B * x1_bytes
    if cost_b_outer <= cost_j_outer:
        grid = (B, nj)
        x_map = lambda bi, j: (bi, 0, 0)
        w_map = lambda bi, j: (0, j)
        o_map = lambda bi, j: (bi, 0, j)
    else:
        grid = (nj, B)
        x_map = lambda j, bi: (bi, 0, 0)
        w_map = lambda j, bi: (0, j)
        o_map = lambda j, bi: (bi, 0, j)

    out = pl.pallas_call(
        functools.partial(_conv_kernel, kh=kh, kcin=kcin, width=W, act=act),
        out_shape=jax.ShapeDtypeStruct((B, H * W, cout), jnp.bfloat16),
        grid=grid,
        in_specs=[
            pl.BlockSpec((1, Hp * W, kcin), x_map),
            pl.BlockSpec((kh * kcin, TN), w_map),
            pl.BlockSpec((1, TN), w_map),
        ],
        out_specs=pl.BlockSpec((1, H * W, TN), o_map),
        compiler_params=pltpu.CompilerParams(
            dimension_semantics=("parallel", "parallel"),
            vmem_limit_bytes=_VMEM_LIMIT),
    )(xs, wq, bq)
    return out.reshape(B, H, W, cout)


# ---------------------------------------------------------------------------
# Pallas kernel: fused self-attention (per batch), bf16 MXU dots, f32 softmax
# ---------------------------------------------------------------------------
def _attn_kernel(q_ref, k_ref, v_ref, o_ref):
    q = q_ref[0]                                   # (n, c)  bf16
    k = k_ref[0]                                   # (c, n)  bf16
    v = v_ref[0]                                   # (n, cv) bf16
    s = jnp.dot(q, k, preferred_element_type=jnp.float32)   # (n, n) f32
    s = s - jnp.max(s, axis=-1, keepdims=True)
    p = jnp.exp(s)
    p = p / jnp.sum(p, axis=-1, keepdims=True)               # exact normalization
    o = jnp.dot(p.astype(v.dtype), v, preferred_element_type=jnp.float32)
    o_ref[0] = o.astype(o_ref.dtype)


@jax.jit
def attention_pallas(q, k, v):
    """Per-batch fused softmax(Q @ K) @ V.  q:(B,n,c) k:(B,c,n) v:(B,n,cv) -> (B,n,cv) bf16."""
    B, n, c = q.shape
    cv = v.shape[-1]
    q = q.astype(jnp.bfloat16)
    k = k.astype(jnp.bfloat16)
    v = v.astype(jnp.bfloat16)
    return pl.pallas_call(
        _attn_kernel,
        out_shape=jax.ShapeDtypeStruct((B, n, cv), jnp.bfloat16),
        grid=(B,),
        in_specs=[
            pl.BlockSpec((1, n, c), lambda b: (b, 0, 0)),
            pl.BlockSpec((1, c, n), lambda b: (b, 0, 0)),
            pl.BlockSpec((1, n, cv), lambda b: (b, 0, 0)),
        ],
        out_specs=pl.BlockSpec((1, n, cv), lambda b: (b, 0, 0)),
        compiler_params=pltpu.CompilerParams(
            dimension_semantics=("parallel",),
            vmem_limit_bytes=_VMEM_LIMIT),
    )(q, k, v)


# ---------------------------------------------------------------------------
# Pallas kernel: fused global avg + max pool (CA)
# ---------------------------------------------------------------------------
def _pool_kernel(x_ref, avg_ref, max_ref):
    x = x_ref[0].astype(jnp.float32)               # (HW, C)
    avg_ref[0] = jnp.mean(x, axis=0, keepdims=True)
    max_ref[0] = jnp.max(x, axis=0, keepdims=True)


@jax.jit
def pool_avg_max(x):
    """Global adaptive avg & max pool to 1x1.  x:(B,H,W,C) -> ((B,C),(B,C)) f32."""
    B, H, W, C = x.shape
    xr = x.reshape(B, H * W, C)
    avg, mx = pl.pallas_call(
        _pool_kernel,
        out_shape=(jax.ShapeDtypeStruct((B, 1, C), jnp.float32),
                   jax.ShapeDtypeStruct((B, 1, C), jnp.float32)),
        grid=(B,),
        in_specs=[pl.BlockSpec((1, H * W, C), lambda b: (b, 0, 0))],
        out_specs=(pl.BlockSpec((1, 1, C), lambda b: (b, 0, 0)),
                   pl.BlockSpec((1, 1, C), lambda b: (b, 0, 0))),
        compiler_params=pltpu.CompilerParams(
            dimension_semantics=("parallel",),
            vmem_limit_bytes=_VMEM_LIMIT),
    )(xr)
    return avg.reshape(B, C), mx.reshape(B, C)


# ---------------------------------------------------------------------------
# Conv dispatch + glue
# ---------------------------------------------------------------------------
def extract_patches(x, kh, kw, pad):
    if pad:
        x = jnp.pad(x, ((0, 0), (pad, pad), (pad, pad), (0, 0)))
    B, Hp, Wp, C = x.shape
    H, W = Hp - kh + 1, Wp - kw + 1
    cols = [x[:, i:i + H, j:j + W, :] for i in range(kh) for j in range(kw)]
    return jnp.concatenate(cols, axis=-1)          # (B, H, W, kh*kw*C)


def conv2d(x, w, b, pad=0, act="none", bn=False):
    """Stride-1 Conv2d (+ optional eval-mode BN fold) + activation, on NHWC, bf16 out."""
    kh, kw, cin, cout = w.shape
    B, H, W, _ = x.shape
    scale = BN_SCALE if bn else 1.0
    if kh == 1 and kw == 1 and pad == 0:
        y = matmul_bias_act(x.reshape(B * H * W, cin), w.reshape(cin, cout), b,
                            act=act, scale=scale)
        return y.reshape(B, H, W, cout)
    if pad == kh // 2 and _direct_ok(B, H, W, kh, kw, cin, cout):
        return conv_direct(x, w, b, act=act, scale=scale)
    # Tiny spatial maps / tiny cin (stem) / oversized blocks: im2col through the matmul.
    patches = extract_patches(x, kh, kw, pad)
    y = matmul_bias_act(patches.reshape(B * H * W, kh * kw * cin),
                        w.reshape(kh * kw * cin, cout), b, act=act, scale=scale)
    return y.reshape(B, H, W, cout)


def cbr(x, p, pad):
    """convblock(...) = Conv2d + BatchNorm2d + ReLU (BN scale folded into weights)."""
    return conv2d(x, p["w"], p["b"], pad=pad, act="relu", bn=True)


# TODO(synk): max/adaptive pooling windows are window-reduce glue kept in plain JAX.
def maxpool2x2(x):
    return lax.reduce_window(x, jnp.array(-jnp.inf, x.dtype), lax.max,
                             (1, 2, 2, 1), (1, 2, 2, 1), "VALID")


def maxpool3x3_s1(x):
    return lax.reduce_window(x, jnp.array(-jnp.inf, x.dtype), lax.max,
                             (1, 3, 3, 1), (1, 1, 1, 1), "SAME")


def adaptive_max_pool(x, s):
    B, H, W, C = x.shape
    rows = []
    for i in range(s):
        hs, he = (i * H) // s, -((-(i + 1) * H) // s)
        cols = []
        for j in range(s):
            ws, we = (j * W) // s, -((-(j + 1) * W) // s)
            cols.append(jnp.max(x[:, hs:he, ws:we, :], axis=(1, 2)))
        rows.append(jnp.stack(cols, axis=1))
    return jnp.stack(rows, axis=1)                 # (B, s, s, C)


def _interp_matrix(out_size, in_size):
    """align_corners=True bilinear interpolation matrix (out_size, in_size), f32."""
    if out_size == 1:
        idx = jnp.zeros((1,), jnp.float32)
    else:
        idx = jnp.arange(out_size, dtype=jnp.float32) * (in_size - 1) / (out_size - 1)
    lo = jnp.floor(idx).astype(jnp.int32)
    hi = jnp.minimum(lo + 1, in_size - 1)
    frac = idx - lo.astype(jnp.float32)
    return (jax.nn.one_hot(lo, in_size, dtype=jnp.float32) * (1.0 - frac)[:, None]
            + jax.nn.one_hot(hi, in_size, dtype=jnp.float32) * frac[:, None])


def bilinear(x, out_h, out_w):
    """F.interpolate(..., mode='bilinear', align_corners=True) as two MXU matmuls."""
    B, H, W, C = x.shape
    if (out_h, out_w) == (H, W):
        return x
    Rm = _interp_matrix(out_h, H).astype(jnp.bfloat16)     # (out_h, H)
    Cm = _interp_matrix(out_w, W).astype(jnp.bfloat16)     # (out_w, W)
    xb = x.astype(jnp.bfloat16)
    y = jnp.einsum('oh,bhwc->bowc', Rm, xb, preferred_element_type=jnp.float32)
    y = jnp.einsum('nw,bowc->bonc', Cm, y.astype(jnp.bfloat16),
                   preferred_element_type=jnp.float32)
    return y.astype(jnp.bfloat16)


# ---------------------------------------------------------------------------
# Parameters (deterministic, mirroring Mnet.__init__: conv weights ~ N(0, 0.01))
# ---------------------------------------------------------------------------
class RNG:
    def __init__(self, seed):
        self._key = jax.random.PRNGKey(seed)

    def next(self):
        self._key, k = jax.random.split(self._key)
        return k


def init_conv(rng, k, cin, cout):
    w = 0.01 * jax.random.normal(rng.next(), (k, k, cin, cout), jnp.float32)
    b = jnp.zeros((cout,), jnp.float32)
    return {"w": w, "b": b}


# ------------------------------- CA ----------------------------------------
def init_ca(rng, c):
    return {"f1": init_conv(rng, 1, c, c // 2), "f2": init_conv(rng, 1, c // 2, c)}


def ca_fwd(x, p):
    B, H, W, C = x.shape
    avg, mx = pool_avg_max(x)
    v = jnp.concatenate([avg, mx], axis=0)                       # (2B, C): one MLP pass
    h = matmul_bias_act(v, p["f1"]["w"].reshape(C, C // 2), p["f1"]["b"],
                        act="relu", scale=1.0)
    o = matmul_bias_act(h, p["f2"]["w"].reshape(C // 2, C), p["f2"]["b"],
                        act="none", scale=1.0)
    mask = jax.nn.sigmoid(o[:B] + o[B:]).astype(x.dtype)
    return x * mask[:, None, None, :]


# ------------------------------- GFM ----------------------------------------
def init_gfm(rng, c):
    return {"n1": init_conv(rng, 1, c, c // 2), "n2": init_conv(rng, 1, c, c // 2),
            "n3": init_conv(rng, 1, c, c // 2), "rt": init_conv(rng, 1, c // 2, c),
            "gam": jnp.zeros((), jnp.float32)}


def gfm_fwd(rgb, t, p):
    B, H, W, C = rgb.shape
    n, c1 = H * W, C // 2
    rgb1 = cbr(rgb, p["n1"], 0)
    t1 = cbr(t, p["n2"], 0)
    t2 = cbr(t, p["n3"], 0)
    q = rgb1.reshape(B, n, c1)                                 # r_1 : (b, hw, c1)
    k = jnp.swapaxes(t1.reshape(B, n, c1), 1, 2)               # t1  : (b, c1, hw)
    v = t2.reshape(B, n, c1)                                   # t2  : (b, hw, c1)
    rt2 = attention_pallas(q, k, v)                            # (b, hw, c1)
    # reproduce torch `.view(b, c1, h, w)` on the contiguous (b, hw, c1) tensor
    rt2 = jnp.transpose(rt2.reshape(B, c1, H, W), (0, 2, 3, 1))
    rt2 = cbr(rt2, p["rt"], 0)
    return p["gam"].astype(rt2.dtype) * rt2 + rgb


# ------------------------------ GFAPM / GFAPF --------------------------------
def init_gfapm(rng, c):
    return {"n1": init_conv(rng, 1, c, c // 4), "n2": init_conv(rng, 1, c, c // 4),
            "n3": init_conv(rng, 1, c, c), "gam": jnp.zeros((), jnp.float32)}


def gfapm_fwd(x1, x2, x3, p):
    B, H, W, C = x1.shape
    n = H * W
    q = cbr(x1, p["n1"], 0).reshape(B, n, C // 4)
    k = jnp.swapaxes(cbr(x2, p["n2"], 0).reshape(B, n, C // 4), 1, 2)
    v = cbr(x3, p["n3"], 0).reshape(B, n, C)                   # = rt_2^T
    o = attention_pallas(q, k, v).reshape(B, H, W, C)          # (V @ P^T)^T laid out NHWC
    return p["gam"].astype(o.dtype) * o + x1


def init_gfapf(rng):
    return {"casa": init_ca(rng, 1024), "de": init_conv(rng, 3, 1024, 256),
            "b0": init_conv(rng, 1, 256, 128), "b1": init_conv(rng, 1, 256, 128),
            "b2": init_conv(rng, 1, 256, 128), "b3": init_conv(rng, 1, 256, 128),
            "fus": init_conv(rng, 1, 768, 512), "gfm": init_gfapm(rng, 128)}


def gfapf_fwd(rgb, t, p):
    H, W = rgb.shape[1:3]
    x = ca_fwd(jnp.concatenate([rgb, t], -1), p["casa"])
    x = cbr(x, p["de"], 1)

    def branch(pp, s):
        y = adaptive_max_pool(x, s)
        y = conv2d(y, pp["w"], pp["b"], 0, act="relu")          # Conv2d(bias=False)+ReLU
        return bilinear(y, H, W)

    b0, b1, b2 = branch(p["b0"], 13), branch(p["b1"], 9), branch(p["b2"], 5)
    b3 = branch(p["b3"], 1)
    o1 = gfapm_fwd(b0, b1, b2, p["gfm"])
    o2 = gfapm_fwd(b1, b2, b0, p["gfm"])
    o3 = gfapm_fwd(b2, b0, b1, p["gfm"])
    return cbr(jnp.concatenate([o1, o2, o3, b3, x], -1), p["fus"], 0)


# ------------------------------ CGFM / CGFM3 / FA -----------------------------
def init_cgfm(rng, in1, in2):
    return {"gfm": init_gfm(rng, in2), "cg": init_conv(rng, 3, 512, 128),
            "casa": init_ca(rng, 2 * in1), "cl": init_conv(rng, 3, 2 * in1, 128),
            "cm": init_conv(rng, 3, in2, 128), "co": init_conv(rng, 3, 128, in2)}


def cgfm_fwd(cu_p, cu_s, cu_pf, cu_pb, gi, p):
    H, W = cu_p.shape[1:3]
    cl1 = ca_fwd(jnp.concatenate([cu_pf, cu_pb], -1), p["casa"])
    cl = cbr(bilinear(cl1, H, W), p["cl"], 1)
    cm = cbr(gfm_fwd(cu_p, cu_s, p["gfm"]), p["cm"], 1)
    gi = cbr(bilinear(gi, H, W), p["cg"], 1)
    return cbr(cl + cm + gi, p["co"], 1)


def init_cgfm3(rng, in1, in2):
    return {"cg": init_conv(rng, 3, 512, 128), "rt_fus": init_conv(rng, 3, in2, in2),
            "casa1": init_ca(rng, in2), "casa": init_ca(rng, 2 * in1),
            "cl": init_conv(rng, 3, 2 * in1, 128), "cm": init_conv(rng, 3, 2 * in2, 128),
            "co": init_conv(rng, 3, 128, in2)}


def cgfm3_fwd(cu_p, cu_s, cu_pf, cu_pb, gi, p):
    H, W = cu_p.shape[1:3]
    cl1 = ca_fwd(jnp.concatenate([cu_pf, cu_pb], -1), p["casa"])
    cl = cbr(bilinear(cl1, H, W), p["cl"], 1)
    cu_p = ca_fwd(cu_p, p["casa1"])
    cu_s = ca_fwd(cu_s, p["casa1"])
    gate = conv2d(cu_s, p["rt_fus"]["w"], p["rt_fus"]["b"], 1, act="sigmoid")
    cross = jnp.concatenate([cu_p + cu_p * gate, cu_s], -1)
    cm = cbr(cross, p["cm"], 1)
    gi = cbr(bilinear(gi, H, W), p["cg"], 1)
    return cbr(cl + cm + gi, p["co"], 1)


def init_fa(rng, in_ch, in_cn):
    return {"casa": init_ca(rng, 2 * in_ch), "conv1": init_conv(rng, 3, 2 * in_ch, 512),
            "br1": init_conv(rng, 1, in_cn, in_cn // 4),
            "br2a": init_conv(rng, 1, in_cn, in_cn // 2),
            "br2b": init_conv(rng, 3, in_cn // 2, in_cn // 4),
            "br3a": init_conv(rng, 1, in_cn, in_cn // 4),
            "br3b": init_conv(rng, 5, in_cn // 4, in_cn // 4),
            "br4": init_conv(rng, 1, in_cn, in_cn // 4)}


def fa_fwd(x1, x2, p):
    x = cbr(ca_fwd(jnp.concatenate([x1, x2], -1), p["casa"]), p["conv1"], 1)
    b1 = conv2d(x, p["br1"]["w"], p["br1"]["b"], 0, act="relu")
    b2 = conv2d(x, p["br2a"]["w"], p["br2a"]["b"], 0, act="relu")
    b2 = conv2d(b2, p["br2b"]["w"], p["br2b"]["b"], 1, act="relu")
    b3 = conv2d(x, p["br3a"]["w"], p["br3a"]["b"], 0, act="relu")
    b3 = conv2d(b3, p["br3b"]["w"], p["br3b"]["b"], 2, act="relu")
    b4 = conv2d(maxpool3x3_s1(x), p["br4"]["w"], p["br4"]["b"], 0, act="relu")
    return jnp.concatenate([b1, b2, b3, b4], -1)


# ------------------------------ VGG16 encoder ---------------------------------
_VGG_CFG = ((64, 2), (128, 2), (256, 3), (512, 3), (512, 3))


def init_vgg(rng):
    params, cin = [], 3
    for cout, reps in _VGG_CFG:
        stage = []
        for _ in range(reps):
            stage.append(init_conv(rng, 3, cin, cout))
            cin = cout
        params.append(stage)
    return params


def vgg_fwd(x, params):
    feats = []
    for si, stage in enumerate(params):
        if si > 0:
            x = maxpool2x2(x)
        for p in stage:
            x = conv2d(x, p["w"], p["b"], 1, act="relu")
        feats.append(x)                    # channels: 64,128,256,512,512 @ H,H/2,H/4,H/8,H/16
    return feats


# ------------------------------ Decoder / Mnet --------------------------------
def init_decoder(rng):
    return {"gfapf": init_gfapf(rng), "score_global": init_conv(rng, 1, 512, 1),
            "fa1": init_fa(rng, 512, 512), "fa2": init_fa(rng, 256, 512),
            "fa3": init_fa(rng, 128, 512),
            "gfb4_1": init_cgfm(rng, 512, 512), "gfb3_1": init_cgfm(rng, 512, 256),
            "gfb2_1": init_cgfm3(rng, 256, 128),
            "gfb4_2": init_cgfm(rng, 512, 512), "gfb3_2": init_cgfm(rng, 512, 256),
            "gfb2_2": init_cgfm3(rng, 256, 128),
            "score_1": init_conv(rng, 1, 128, 1), "score_2": init_conv(rng, 1, 128, 1),
            "refine": init_conv(rng, 1, 512, 1)}


def decoder_fwd(rgb_f, t_f, p):
    xh, xw = rgb_f[0].shape[1:3]
    gi = gfapf_fwd(rgb_f[4], t_f[4], p["gfapf"])
    score_global = conv2d(gi, p["score_global"]["w"], p["score_global"]["b"], 0)
    d1 = cgfm_fwd(rgb_f[3], t_f[3], t_f[4], rgb_f[4], gi, p["gfb4_1"])
    d2 = cgfm_fwd(t_f[3], rgb_f[3], rgb_f[4], t_f[4], gi, p["gfb4_2"])
    gi = fa_fwd(d1, d2, p["fa1"])
    d3 = cgfm_fwd(rgb_f[2], t_f[2], d1, d2, gi, p["gfb3_1"])
    d4 = cgfm_fwd(t_f[2], rgb_f[2], d2, d1, gi, p["gfb3_2"])
    gi = fa_fwd(d3, d4, p["fa2"])
    d5 = cgfm3_fwd(rgb_f[1], t_f[1], d3, d4, gi, p["gfb2_1"])
    d6 = cgfm3_fwd(t_f[1], rgb_f[1], d4, d3, gi, p["gfb2_2"])
    gi = fa_fwd(d5, d6, p["fa3"])
    score1 = conv2d(bilinear(d5, xh, xw), p["score_1"]["w"], p["score_1"]["b"], 0)
    score2 = conv2d(bilinear(d6, xh, xw), p["score_2"]["w"], p["score_2"]["b"], 0)
    score = bilinear(conv2d(gi, p["refine"]["w"], p["refine"]["b"], 0), xh, xw)
    score_global = bilinear(score_global, xh, xw)
    return score, score1, score2, score_global


def init_mnet(seed=0):
    rng = RNG(seed)
    return {"rgb_net": init_vgg(rng), "t_net": init_vgg(rng), "decoder": init_decoder(rng)}


def mnet_forward(params, rgb_nchw, t_nchw):
    rgb = jnp.transpose(rgb_nchw, (0, 2, 3, 1))
    t = jnp.transpose(t_nchw, (0, 2, 3, 1))
    rgb_f = vgg_fwd(rgb, params["rgb_net"])
    t_f = vgg_fwd(t, params["t_net"])
    s, s1, s2, sg = decoder_fwd(rgb_f, t_f, params["decoder"])
    to_nchw = lambda a: jnp.transpose(jax.nn.sigmoid(a.astype(jnp.float32)), (0, 3, 1, 2))
    return to_nchw(s), to_nchw(s1), to_nchw(s2), to_nchw(sg)


# ---------------------------------------------------------------------------
if __name__ == "__main__":
    params = init_mnet(0)
    key = jax.random.PRNGKey(0)
    k1, k2 = jax.random.split(key)
    B, H, W = 2, 64, 64
    rgb = jax.random.normal(k1, (B, 3, H, W), jnp.float32)
    t = jax.random.normal(k2, (B, 3, H, W), jnp.float32)

    outs = mnet_forward(params, rgb, t)
    outs = jax.block_until_ready(outs)

    for name, o in zip(("score", "score1", "score2", "score_global"), outs):
        assert o.shape == (B, 1, H, W), (name, o.shape)
        assert bool(jnp.all(jnp.isfinite(o))), name
        assert bool(jnp.all((o >= 0.0) & (o <= 1.0))), name
    print("KERNEL_OK")
</pallas_src>

<mosaic_0001>
module attributes {stable_mosaic.version = 11 : i64} {
  func.func @_mm_kernel(%arg0: i32, %arg1: i32, %arg2: i32, %arg3: memref<512x32xbf16, #tpu.memory_space<vmem>>, %arg4: memref<32x64xbf16, #tpu.memory_space<vmem>>, %arg5: memref<1x64xf32, #tpu.memory_space<vmem>>, %arg6: memref<512x64xbf16, #tpu.memory_space<vmem>>, %arg7: memref<512x64xf32, #tpu.memory_space<vmem>>) attributes {dimension_semantics = [#tpu.dimension_semantics<parallel>, #tpu.dimension_semantics<parallel>, #tpu.dimension_semantics<arbitrary>], iteration_bounds = array<i64: 16, 1, 1>, scalar_prefetch = 0 : i64, scratch_operands = 1 : i64, tpu.core_type = #tpu.core_type<tc>, window_params = [{transform_indices = @transform_0, window_bounds = array<i64: 512, 32>}, {transform_indices = @transform_1, window_bounds = array<i64: 32, 64>}, {transform_indices = @transform_2, window_bounds = array<i64: 1, 64>}, {transform_indices = @transform_3, window_bounds = array<i64: 512, 64>}]} {
    %c0_i32 = arith.constant 0 : i32
    %0 = arith.cmpi eq, %arg2, %c0_i32 : i32
    %1 = arith.extui %0 : i1 to i32
    %c0_i32_0 = arith.constant 0 : i32
    %2 = arith.cmpi ne, %1, %c0_i32_0 : i32
    scf.if %2 {
      %cst_10 = arith.constant 0.000000e+00 : f32
      %12 = vector.broadcast %cst_10 : f32 to vector<512x64xf32>
      %c0_11 = arith.constant 0 : index
      %c0_12 = arith.constant 0 : index
      %13 = vector.load %arg7[%c0_11, %c0_12] : memref<512x64xf32, #tpu.memory_space<vmem>>, vector<512x64xf32>
      tpu.vector_store %arg7[%c0_11, %c0_12], %12 {strides = array<i32>} : memref<512x64xf32, #tpu.memory_space<vmem>>, vector<512x64xf32>,
    } else {
    }
    %c0 = arith.constant 0 : index
    %c0_1 = arith.constant 0 : index
    %3 = vector.load %arg7[%c0, %c0_1] : memref<512x64xf32, #tpu.memory_space<vmem>>, vector<512x64xf32>
    %c0_2 = arith.constant 0 : index
    %c0_3 = arith.constant 0 : index
    %4 = vector.load %arg3[%c0_2, %c0_3] : memref<512x32xbf16, #tpu.memory_space<vmem>>, vector<512x32xbf16>
    %c0_4 = arith.constant 0 : index
    %c0_5 = arith.constant 0 : index
    %5 = vector.load %arg4[%c0_4, %c0_5] : memref<32x64xbf16, #tpu.memory_space<vmem>>, vector<32x64xbf16>
    %cst = arith.constant dense<0.000000e+00> : vector<512x64xf32>
    %6 = tpu.matmul %4, %5, %cst {dimension_numbers = #tpu.dot_dimension_numbers<[1], [0], [0], [1], [0, 0, 1, 1], [], []>} : vector<512x32xbf16>, vector<32x64xbf16>, vector<512x64xf32> -> vector<512x64xf32>
    %7 = arith.addf %3, %6 : vector<512x64xf32>
    %c0_6 = arith.constant 0 : index
    %c0_7 = arith.constant 0 : index
    %8 = vector.load %arg7[%c0_6, %c0_7] : memref<512x64xf32, #tpu.memory_space<vmem>>, vector<512x64xf32>
    tpu.vector_store %arg7[%c0_6, %c0_7], %7 {strides = array<i32>} : memref<512x64xf32, #tpu.memory_space<vmem>>, vector<512x64xf32>,
    %c0_i32_8 = arith.constant 0 : i32
    %9 = arith.cmpi eq, %arg2, %c0_i32_8 : i32
    %10 = arith.extui %9 : i1 to i32
    %c0_i32_9 = arith.constant 0 : i32
    %11 = arith.cmpi ne, %10, %c0_i32_9 : i32
    scf.if %11 {
      %c0_10 = arith.constant 0 : index
      %c0_11 = arith.constant 0 : index
      %12 = vector.load %arg7[%c0_10, %c0_11] : memref<512x64xf32, #tpu.memory_space<vmem>>, vector<512x64xf32>
      %c0_12 = arith.constant 0 : index
      %c0_13 = arith.constant 0 : index
      %13 = vector.load %arg5[%c0_12, %c0_13] : memref<1x64xf32, #tpu.memory_space<vmem>>, vector<1x64xf32>
      %14 = vector.broadcast %13 : vector<1x64xf32> to vector<512x64xf32>
      %15 = arith.addf %12, %14 : vector<512x64xf32>
      %cst_14 = arith.constant 0.000000e+00 : f32
      %16 = vector.broadcast %cst_14 : f32 to vector<512x64xf32>
      %17 = arith.maximumf %15, %16 : vector<512x64xf32>
      %18 = arith.truncf %17 : vector<512x64xf32> to vector<512x64xbf16>
      %c0_15 = arith.constant 0 : index
      %c0_16 = arith.constant 0 : index
      %19 = vector.load %arg6[%c0_15, %c0_16] : memref<512x64xbf16, #tpu.memory_space<vmem>>, vector<512x64xbf16>
      tpu.vector_store %arg6[%c0_15, %c0_16], %18 {strides = array<i32>} : memref<512x64xbf16, #tpu.memory_space<vmem>>, vector<512x64xbf16>,
    } else {
    }
    return
  }
  func.func @transform_0(%arg0: i32, %arg1: i32, %arg2: i32) -> (i32, i32) {
    %c0_i32 = arith.constant 0 : i32
    return %arg0, %arg2 : i32, i32
  }
  func.func @transform_1(%arg0: i32, %arg1: i32, %arg2: i32) -> (i32, i32) {
    %c0_i32 = arith.constant 0 : i32
    return %arg2, %arg1 : i32, i32
  }
  func.func @transform_2(%arg0: i32, %arg1: i32, %arg2: i32) -> (i32, i32) {
    %c0_i32 = arith.constant 0 : i32
    %c0_i32_0 = arith.constant 0 : i32
    return %c0_i32, %arg1 : i32, i32
  }
  func.func @transform_3(%arg0: i32, %arg1: i32, %arg2: i32) -> (i32, i32) {
    %c0_i32 = arith.constant 0 : i32
    return %arg0, %arg1 : i32, i32
  }
}

</mosaic_0001>

<llo_original>
// kernel: matmul_bias_act.1
$region0: #{matmul_bias_act.1}
  #allocation0 [shape = 'u32[]', space=smem, size = 0x4, offset = 0x4, fixed_abs, tag = 'smem constant byte address 0x4 - core index']
  #allocation1 [shape = 'u32[72,128]{1,0:T(1,128)}', space=vmem, size = 0x9000, scoped, tag = 'internal scratch']
  #allocation2 [shape = 'f32[512,64]{1,0:T(8,128)}', space=vmem, size = 0x40000, scoped, tag = 'scratch operand']
  %s0 = inlined_call_operand.vmem [shape: bf16[8192,32], index: 0, kind: input, shape index: {}]
  %s1 = inlined_call_operand.vmem [shape: bf16[32,64], index: 1, kind: input, shape index: {}]
  %s2 = inlined_call_operand.vmem [shape: f32[1,64], index: 2, kind: input, shape index: {}]
  %s3 = inlined_call_operand.vmem [shape: bf16[8192,64], index: 3, kind: output, shape index: {}]
  %s4 = sld [smem:[#allocation0]]
  $region53: #{matmul_bias_act.1} parent=0
    _
  %s6 = ssub.s32 1, %s4
  %s7 = scalar_select 0, %s6, %s4
  loop: start=0, step=1, limit=18
  $region2: #{matmul_bias_act.1} parent=0 // loop_pre_header
    _
  $region3: #{matmul_bias_act.1} parent=0 // loop_header
    %s9 = sphi 0, %s13
    %p10 = scmp.ge.s32.totalorder %s9, 18
    %s16 = sphi 0, %s35
    %s17 = sphi 0, %s31
    %s18 = sphi 0, %s27
    %s19 = sphi 0, %s16
    %s20 = sphi 0, %s17
    %s21 = sphi 0, %s18
    %s22 = sphi 0, %s19
    %s23 = sphi 0, %s20
    %s24 = sphi 0, %s21
    %s40 = sphi 0, %s42
    %s43 = sphi 0, %s40
    %s44 = sphi 0, %s43
    %s60 = sphi 0, %s44
    %s68 = sphi 0, %s70
    %s71 = sphi 0, %s68
    %s72 = sphi 0, %s71
    %s88 = sphi 0, %s72
    %s94 = sphi 0, %s96
    %s97 = sphi 0, %s94
    %s98 = sphi 0, %s97
    %s114 = sphi 0, %s98
    %s122 = sphi 0, %s124
    %s125 = sphi 0, %s122
    %s126 = sphi 0, %s125
    %s142 = sphi 0, %s126
  $region4: #{matmul_bias_act.1} parent=0 // loop_header_branch
    %12 = sbr.rel (%p10) target = $region8
  $region5: #{matmul_bias_act.1} parent=0 // loop_body
    %s14 = ssub.s32 %s9, 1
    %s15 = ssub.s32 %s9, 2
    %s25 = sadd.s32 1, %s18
    %p26 = scmp.ge.s32.totalorder %s25, 1
    %s27 = scalar_select %p26, 0, %s25
    %s28 = sadd.s32 1, %s17
    %s29 = scalar_select %p26, %s28, %s17
    %p30 = scmp.ge.s32.totalorder %s29, 1
    %s31 = scalar_select %p30, 0, %s29
    %s32 = sadd.s32 1, %s16
    %s33 = scalar_select %p30, %s32, %s16
    %p34 = scmp.ge.s32.totalorder %s33, 16
    %s35 = scalar_select %p34, 0, %s33
    %s36 = ssub.s32 %s16, %s35
    %s37 = ssub.s32 %s18, %s27
    %s38 = sor.u32 %s36, %s37
    %p39 = scmp.eq.s32.totalorder %s38, 0
    %s41 = sadd.s32 %s40, 1
    %s42 = scalar_select %p39, %s40, %s41
    %p45 = pneg %p39
    %p46 = scmp.eq.s32.totalorder %s9, 15
    %p47 = por %p45, %p46
    %p48 = scmp.ne.s32.totalorder %s40, %s43
    %p49 = scmp.eq.s32.totalorder %s9, 0
    %p50 = por %p48, %p49
    %p51 = scmp.ne.s32.totalorder %s40, %s43
    %p52 = scmp.eq.s32.totalorder %s14, 15
    %p53 = por %p51, %p52
    %p54 = scmp.ne.s32.totalorder %s43, %s44
    %p55 = scmp.eq.s32.totalorder %s14, 0
    %p56 = por %p54, %p55
    %p57 = scmp.ne.s32.totalorder %s43, %s44
    %p58 = scmp.eq.s32.totalorder %s15, 15
    %p59 = por %p57, %p58
    %p61 = scmp.ne.s32.totalorder %s44, %s60
    %p62 = scmp.eq.s32.totalorder %s15, 0
    %p63 = por %p61, %p62
    %s64 = ssub.s32 %s18, %s27
    %s65 = ssub.s32 %s17, %s31
    %s66 = sor.u32 %s64, %s65
    %p67 = scmp.eq.s32.totalorder %s66, 0
    %s69 = sadd.s32 %s68, 1
    %s70 = scalar_select %p67, %s68, %s69
    %p73 = pneg %p67
    %p74 = scmp.eq.s32.totalorder %s9, 15
    %p75 = por %p73, %p74
    %p76 = scmp.ne.s32.totalorder %s68, %s71
    %p77 = scmp.eq.s32.totalorder %s9, 0
    %p78 = por %p76, %p77
    %p79 = scmp.ne.s32.totalorder %s68, %s71
    %p80 = scmp.eq.s32.totalorder %s14, 15
    %p81 = por %p79, %p80
    %p82 = scmp.ne.s32.totalorder %s71, %s72
    %p83 = scmp.eq.s32.totalorder %s14, 0
    %p84 = por %p82, %p83
    %p85 = scmp.ne.s32.totalorder %s71, %s72
    %p86 = scmp.eq.s32.totalorder %s15, 15
    %p87 = por %p85, %p86
    %p89 = scmp.ne.s32.totalorder %s72, %s88
    %p90 = scmp.eq.s32.totalorder %s15, 0
    %p91 = por %p89, %p90
    %s92 = ssub.s32 %s17, %s31
    %p93 = scmp.eq.s32.totalorder %s92, 0
    %s95 = sadd.s32 %s94, 1
    %s96 = scalar_select %p93, %s94, %s95
    %p99 = pneg %p93
    %p100 = scmp.eq.s32.totalorder %s9, 15
    %p101 = por %p99, %p100
    %p102 = scmp.ne.s32.totalorder %s94, %s97
    %p103 = scmp.eq.s32.totalorder %s9, 0
    %p104 = por %p102, %p103
    %p105 = scmp.ne.s32.totalorder %s94, %s97
    %p106 = scmp.eq.s32.totalorder %s14, 15
    %p107 = por %p105, %p106
    %p108 = scmp.ne.s32.totalorder %s97, %s98
    %p109 = scmp.eq.s32.totalorder %s14, 0
    %p110 = por %p108, %p109
    %p111 = scmp.ne.s32.totalorder %s97, %s98
    %p112 = scmp.eq.s32.totalorder %s15, 15
    %p113 = por %p111, %p112
    %p115 = scmp.ne.s32.totalorder %s98, %s114
    %p116 = scmp.eq.s32.totalorder %s15, 0
    %p117 = por %p115, %p116
    %s118 = ssub.s32 %s16, %s35
    %s119 = ssub.s32 %s17, %s31
    %s120 = sor.u32 %s118, %s119
    %p121 = scmp.eq.s32.totalorder %s120, 0
    %s123 = sadd.s32 %s122, 1
    %s124 = scalar_select %p121, %s122, %s123
    %p127 = pneg %p121
    %p128 = scmp.eq.s32.totalorder %s9, 15
    %p129 = por %p127, %p128
    %p130 = scmp.ne.s32.totalorder %s122, %s125
    %p131 = scmp.eq.s32.totalorder %s9, 0
    %p132 = por %p130, %p131
    %p133 = scmp.ne.s32.totalorder %s122, %s125
    %p134 = scmp.eq.s32.totalorder %s14, 15
    %p135 = por %p133, %p134
    %p136 = scmp.ne.s32.totalorder %s125, %s126
    %p137 = scmp.eq.s32.totalorder %s14, 0
    %p138 = por %p136, %p137
    %p139 = scmp.ne.s32.totalorder %s125, %s126
    %p140 = scmp.eq.s32.totalorder %s15, 15
    %p141 = por %p139, %p140
    %p143 = scmp.ne.s32.totalorder %s126, %s142
    %p144 = scmp.eq.s32.totalorder %s15, 0
    %p145 = por %p143, %p144
    %p146 = scmp.le.s32.totalorder 1, %s9
    %p147 = scmp.lt.s32.totalorder %s9, 17
    %p148 = pnand %p146, %p147
    %p149 = pneg %p148
    // Predicated region
    $region9: #{matmul_bias_act.1} parent=5 // pred_check
      _
    $region10: #{matmul_bias_act.1} parent=5 // pred_check_branch
      %151 = sbr.rel (%p148) target = $region12
    $region11: #{matmul_bias_act.1} parent=5 // pred_region
      %s152 = ssub.s32 %s9, 1
      // Predicated region
      $region13: #{matmul_bias_act.1} parent=11 // pred_check
        %p153 = pneg %p84
      $region14: #{matmul_bias_act.1} parent=11 // pred_check_branch
        %155 = sbr.rel (%p153) target = $region16
      $region15: #{matmul_bias_act.1} parent=11 // pred_region
        %s156 = smul.u32 4, %s21
        %p157 = scmp.lt.s32.totalorder %s156, 3
        %s158 = scalar_select %p157, %s156, 3
        %p159 = scmp.lt.s32.totalorder %s20, 0
        %s160 = scalar_select %p159, %s20, 0
        %s161 = sadd.s32 %s160, %s158
        %s162 = smul.addr %s161, 4
        %s163 = scalar_lea.vmem %s1, %s162
        %s164 = smul.u32 4, %s21
      $region16: #{matmul_bias_act.1} parent=11 // pred_fallthru
        _
      // Predicated region
      $region17: #{matmul_bias_act.1} parent=11 // pred_check
        %p165 = pneg %p110
      $region18: #{matmul_bias_act.1} parent=11 // pred_check_branch
        %167 = sbr.rel (%p165) target = $region20
      $region19: #{matmul_bias_act.1} parent=11 // pred_region
        %p168 = scmp.lt.s32.totalorder %s20, 0
        %s169 = scalar_select %p168, %s20, 0
        %s170 = scalar_lea.vmem %s2, %s169
      $region20: #{matmul_bias_act.1} parent=11 // pred_fallthru
        _
    $region12: #{matmul_bias_act.1} parent=5 // pred_fallthru
      _
    %p171 = scmp.lt.s32.totalorder %s9, 16
    // Predicated region
    $region21: #{matmul_bias_act.1} parent=5 // pred_check
      %p172 = pneg %p171
    $region22: #{matmul_bias_act.1} parent=5 // pred_check_branch
      %174 = sbr.rel (%p172) target = $region24
    $region23: #{matmul_bias_act.1} parent=5 // pred_region
      // Predicated region
      $region25: #{matmul_bias_act.1} parent=23 // pred_check
        %p175 = pneg %p50
      $region26: #{matmul_bias_act.1} parent=23 // pred_check_branch
        %177 = sbr.rel (%p175) target = $region28
      $region27: #{matmul_bias_act.1} parent=23 // pred_region
        %s178 = smul.u32 64, %s16
        %p179 = scmp.lt.s32.totalorder %s178, 1023
        %s180 = scalar_select %p179, %s178, 1023
        %p181 = scmp.lt.s32.totalorder %s18, 0
        %s182 = scalar_select %p181, %s18, 0
        %s183 = sadd.s32 %s182, %s180
        %s184 = smul.addr %s183, 4
        %s185 = scalar_lea.vmem %s0, %s184
        %s186 = smul.u32 64, %s16
      $region28: #{matmul_bias_act.1} parent=23 // pred_fallthru
        _
    $region24: #{matmul_bias_act.1} parent=5 // pred_fallthru
      _
    %p187 = scmp.le.s32.totalorder 1, %s9
    %p188 = scmp.lt.s32.totalorder %s9, 17
    %p189 = pnand %p187, %p188
    %p190 = pneg %p189
    // Predicated region
    $region29: #{matmul_bias_act.1} parent=5 // pred_check
      _
    $region30: #{matmul_bias_act.1} parent=5 // pred_check_branch
      %192 = sbr.rel (%p189) target = $region32
    $region31: #{matmul_bias_act.1} parent=5 // pred_region
      %s193 = ssub.s32 %s9, 1
      %s194 = smul.u32 64, %s19
      %p195 = scmp.lt.s32.totalorder %s194, 1023
      %s196 = scalar_select %p195, %s194, 1023
      %p197 = scmp.lt.s32.totalorder %s21, 0
      %s198 = scalar_select %p197, %s21, 0
      %s199 = sadd.s32 %s198, %s196
      %s200 = smul.addr %s199, 4
      %s201 = scalar_lea.vmem %s0, %s200
      %p202 = pneg %p56
      %p203 = pneg %p53
      %s204 = smul.u32 4, %s21
      %p205 = scmp.lt.s32.totalorder %s204, 3
      %s206 = scalar_select %p205, %s204, 3
      %p207 = scmp.lt.s32.totalorder %s20, 0
      %s208 = scalar_select %p207, %s20, 0
      %s209 = sadd.s32 %s208, %s206
      %s210 = smul.addr %s209, 4
      %s211 = scalar_lea.vmem %s1, %s210
      %p212 = pneg %p84
      %p213 = pneg %p81
      %p214 = scmp.lt.s32.totalorder %s20, 0
      %s215 = scalar_select %p214, %s20, 0
      %s216 = scalar_lea.vmem %s2, %s215
      %p217 = pneg %p110
      %p218 = pneg %p107
      %p219 = pneg %p138
      %p220 = pneg %p135
      %s221 = smul.u32 64, %s19
      %p222 = scmp.lt.s32.totalorder %s221, 1023
      %s223 = scalar_select %p222, %s221, 1023
      %p224 = scmp.lt.s32.totalorder %s20, 0
      %s225 = scalar_select %p224, %s20, 0
      %s226 = sadd.s32 %s225, %s223
      %s227 = smul.addr %s226, 4
      %s228 = scalar_lea.vmem %s3, %s227
      %s229 = smul.u32 64, %s19
      %p230 = scmp.lt.s32.totalorder %s229, 1023
      %s231 = scalar_select %p230, %s229, 1023
      %p232 = scmp.lt.s32.totalorder %s21, 0
      %s233 = scalar_select %p232, %s21, 0
      %s234 = sadd.s32 %s233, %s231
      %s235 = smul.addr %s234, 4
      %s236 = scalar_lea.vmem %s0, %s235
      %s237 = smul.u32 64, %s19
      %s238 = smul.u32 4, %s21
      %p239 = scmp.lt.s32.totalorder %s238, 3
      %s240 = scalar_select %p239, %s238, 3
      %p241 = scmp.lt.s32.totalorder %s20, 0
      %s242 = scalar_select %p241, %s20, 0
      %s243 = sadd.s32 %s242, %s240
      %s244 = smul.addr %s243, 4
      %s245 = scalar_lea.vmem %s1, %s244
      %s246 = smul.u32 4, %s21
      %p247 = scmp.lt.s32.totalorder %s20, 0
      %s248 = scalar_select %p247, %s20, 0
      %s249 = scalar_lea.vmem %s2, %s248
      %s250 = smul.u32 64, %s19
      %p251 = scmp.lt.s32.totalorder %s250, 1023
      %s252 = scalar_select %p251, %s250, 1023
      %p253 = scmp.lt.s32.totalorder %s20, 0
      %s254 = scalar_select %p253, %s20, 0
      %s255 = sadd.s32 %s254, %s252
      %s256 = smul.addr %s255, 4
      %s257 = scalar_lea.vmem %s3, %s256
      %s258 = smul.u32 64, %s19
      %p260 = scmp.eq.s32.totalorder %s21, 0
      // Predicated region
      $region33: #{matmul_bias_act.1} parent=31 // pred_check
        %p261 = pneg %p260
      $region34: #{matmul_bias_act.1} parent=31 // pred_check_branch
        %263 = sbr.rel (%p261) target = $region36
      $region35: #{matmul_bias_act.1} parent=31 // pred_region
        %vm264 = vcmask 523264
        %265 = vst.msk [vmem:[#allocation2] sm:$0xff] %vm264, 0.0
        %266 = vst.msk [vmem:[#allocation2 + $0x8] sm:$0xff] %vm264, 0.0
        %267 = vst.msk [vmem:[#allocation2 + $0x10] sm:$0xff] %vm264, 0.0
        %268 = vst.msk [vmem:[#allocation2 + $0x18] sm:$0xff] %vm264, 0.0
        %269 = vst.msk [vmem:[#allocation2 + $0x20] sm:$0xff] %vm264, 0.0
        %270 = vst.msk [vmem:[#allocation2 + $0x28] sm:$0xff] %vm264, 0.0
        %271 = vst.msk [vmem:[#allocation2 + $0x30] sm:$0xff] %vm264, 0.0
        %272 = vst.msk [vmem:[#allocation2 + $0x38] sm:$0xff] %vm264, 0.0
        %273 = vst.msk [vmem:[#allocation2 + $0x40] sm:$0xff] %vm264, 0.0
        %274 = vst.msk [vmem:[#allocation2 + $0x48] sm:$0xff] %vm264, 0.0
        %275 = vst.msk [vmem:[#allocation2 + $0x50] sm:$0xff] %vm264, 0.0
        %276 = vst.msk [vmem:[#allocation2 + $0x58] sm:$0xff] %vm264, 0.0
        %277 = vst.msk [vmem:[#allocation2 + $0x60] sm:$0xff] %vm264, 0.0
        %278 = vst.msk [vmem:[#allocation2 + $0x68] sm:$0xff] %vm264, 0.0
        %279 = vst.msk [vmem:[#allocation2 + $0x70] sm:$0xff] %vm264, 0.0
        %280 = vst.msk [vmem:[#allocation2 + $0x78] sm:$0xff] %vm264, 0.0
        %281 = vst.msk [vmem:[#allocation2 + $0x80] sm:$0xff] %vm264, 0.0
        %282 = vst.msk [vmem:[#allocation2 + $0x88] sm:$0xff] %vm264, 0.0
        %283 = vst.msk [vmem:[#allocation2 + $0x90] sm:$0xff] %vm264, 0.0
        %284 = vst.msk [vmem:[#allocation2 + $0x98] sm:$0xff] %vm264, 0.0
        %285 = vst.msk [vmem:[#allocation2 + $0xa0] sm:$0xff] %vm264, 0.0
        %286 = vst.msk [vmem:[#allocation2 + $0xa8] sm:$0xff] %vm264, 0.0
        %287 = vst.msk [vmem:[#allocation2 + $0xb0] sm:$0xff] %vm264, 0.0
        %288 = vst.msk [vmem:[#allocation2 + $0xb8] sm:$0xff] %vm264, 0.0
        %289 = vst.msk [vmem:[#allocation2 + $0xc0] sm:$0xff] %vm264, 0.0
        %290 = vst.msk [vmem:[#allocation2 + $0xc8] sm:$0xff] %vm264, 0.0
        %291 = vst.msk [vmem:[#allocation2 + $0xd0] sm:$0xff] %vm264, 0.0
        %292 = vst.msk [vmem:[#allocation2 + $0xd8] sm:$0xff] %vm264, 0.0
        %293 = vst.msk [vmem:[#allocation2 + $0xe0] sm:$0xff] %vm264, 0.0
        %294 = vst.msk [vmem:[#allocation2 + $0xe8] sm:$0xff] %vm264, 0.0
        %295 = vst.msk [vmem:[#allocation2 + $0xf0] sm:$0xff] %vm264, 0.0
        %296 = vst.msk [vmem:[#allocation2 + $0xf8] sm:$0xff] %vm264, 0.0
        %297 = vst.msk [vmem:[#allocation2 + $0x100] sm:$0xff] %vm264, 0.0
        %298 = vst.msk [vmem:[#allocation2 + $0x108] sm:$0xff] %vm264, 0.0
        %299 = vst.msk [vmem:[#allocation2 + $0x110] sm:$0xff] %vm264, 0.0
        %300 = vst.msk [vmem:[#allocation2 + $0x118] sm:$0xff] %vm264, 0.0
        %301 = vst.msk [vmem:[#allocation2 + $0x120] sm:$0xff] %vm264, 0.0
        %302 = vst.msk [vmem:[#allocation2 + $0x128] sm:$0xff] %vm264, 0.0
        %303 = vst.msk [vmem:[#allocation2 + $0x130] sm:$0xff] %vm264, 0.0
        %304 = vst.msk [vmem:[#allocation2 + $0x138] sm:$0xff] %vm264, 0.0
        %305 = vst.msk [vmem:[#allocation2 + $0x140] sm:$0xff] %vm264, 0.0
        %306 = vst.msk [vmem:[#allocation2 + $0x148] sm:$0xff] %vm264, 0.0
        %307 = vst.msk [vmem:[#allocation2 + $0x150] sm:$0xff] %vm264, 0.0
        %308 = vst.msk [vmem:[#allocation2 + $0x158] sm:$0xff] %vm264, 0.0
        %309 = vst.msk [vmem:[#allocation2 + $0x160] sm:$0xff] %vm264, 0.0
        %310 = vst.msk [vmem:[#allocation2 + $0x168] sm:$0xff] %vm264, 0.0
        %311 = vst.msk [vmem:[#allocation2 + $0x170] sm:$0xff] %vm264, 0.0
        %312 = vst.msk [vmem:[#allocation2 + $0x178] sm:$0xff] %vm264, 0.0
        %313 = vst.msk [vmem:[#allocation2 + $0x180] sm:$0xff] %vm264, 0.0
        %314 = vst.msk [vmem:[#allocation2 + $0x188] sm:$0xff] %vm264, 0.0
        %315 = vst.msk [vmem:[#allocation2 + $0x190] sm:$0xff] %vm264, 0.0
        %316 = vst.msk [vmem:[#allocation2 + $0x198] sm:$0xff] %vm264, 0.0
        %317 = vst.msk [vmem:[#allocation2 + $0x1a0] sm:$0xff] %vm264, 0.0
        %318 = vst.msk [vmem:[#allocation2 + $0x1a8] sm:$0xff] %vm264, 0.0
        %319 = vst.msk [vmem:[#allocation2 + $0x1b0] sm:$0xff] %vm264, 0.0
        %320 = vst.msk [vmem:[#allocation2 + $0x1b8] sm:$0xff] %vm264, 0.0
        %321 = vst.msk [vmem:[#allocation2 + $0x1c0] sm:$0xff] %vm264, 0.0
        %322 = vst.msk [vmem:[#allocation2 + $0x1c8] sm:$0xff] %vm264, 0.0
        %323 = vst.msk [vmem:[#allocation2 + $0x1d0] sm:$0xff] %vm264, 0.0
        %324 = vst.msk [vmem:[#allocation2 + $0x1d8] sm:$0xff] %vm264, 0.0
        %325 = vst.msk [vmem:[#allocation2 + $0x1e0] sm:$0xff] %vm264, 0.0
        %326 = vst.msk [vmem:[#allocation2 + $0x1e8] sm:$0xff] %vm264, 0.0
        %327 = vst.msk [vmem:[#allocation2 + $0x1f0] sm:$0xff] %vm264, 0.0
        %328 = vst.msk [vmem:[#allocation2 + $0x1f8] sm:$0xff] %vm264, 0.0
      $region36: #{matmul_bias_act.1} parent=31 // pred_fallthru
        _
      %v329 = vld [vmem:[#allocation2] sm:$0xff]
      %v330 = vld [vmem:[#allocation2 + $0x8] sm:$0xff]
      %v331 = vld [vmem:[#allocation2 + $0x10] sm:$0xff]
      %v332 = vld [vmem:[#allocation2 + $0x18] sm:$0xff]
      %v333 = vld [vmem:[#allocation2 + $0x20] sm:$0xff]
      %v334 = vld [vmem:[#allocation2 + $0x28] sm:$0xff]
      %v335 = vld [vmem:[#allocation2 + $0x30] sm:$0xff]
      %v336 = vld [vmem:[#allocation2 + $0x38] sm:$0xff]
      %v337 = vld [vmem:[#allocation2 + $0x40] sm:$0xff]
      %v338 = vld [vmem:[#allocation2 + $0x48] sm:$0xff]
      %v339 = vld [vmem:[#allocation2 + $0x50] sm:$0xff]
      %v340 = vld [vmem:[#allocation2 + $0x58] sm:$0xff]
      %v341 = vld [vmem:[#allocation2 + $0x60] sm:$0xff]
      %v342 = vld [vmem:[#allocation2 + $0x68] sm:$0xff]
      %v343 = vld [vmem:[#allocation2 + $0x70] sm:$0xff]
      %v344 = vld [vmem:[#allocation2 + $0x78] sm:$0xff]
      %v345 = vld [vmem:[#allocation2 + $0x80] sm:$0xff]
      %v346 = vld [vmem:[#allocation2 + $0x88] sm:$0xff]
      %v347 = vld [vmem:[#allocation2 + $0x90] sm:$0xff]
      %v348 = vld [vmem:[#allocation2 + $0x98] sm:$0xff]
      %v349 = vld [vmem:[#allocation2 + $0xa0] sm:$0xff]
      %v350 = vld [vmem:[#allocation2 + $0xa8] sm:$0xff]
      %v351 = vld [vmem:[#allocation2 + $0xb0] sm:$0xff]
      %v352 = vld [vmem:[#allocation2 + $0xb8] sm:$0xff]
      %v353 = vld [vmem:[#allocation2 + $0xc0] sm:$0xff]
      %v354 = vld [vmem:[#allocation2 + $0xc8] sm:$0xff]
      %v355 = vld [vmem:[#allocation2 + $0xd0] sm:$0xff]
      %v356 = vld [vmem:[#allocation2 + $0xd8] sm:$0xff]
      %v357 = vld [vmem:[#allocation2 + $0xe0] sm:$0xff]
      %v358 = vld [vmem:[#allocation2 + $0xe8] sm:$0xff]
      %v359 = vld [vmem:[#allocation2 + $0xf0] sm:$0xff]
      %v360 = vld [vmem:[#allocation2 + $0xf8] sm:$0xff]
      %v361 = vld [vmem:[#allocation2 + $0x100] sm:$0xff]
      %v362 = vld [vmem:[#allocation2 + $0x108] sm:$0xff]
      %v363 = vld [vmem:[#allocation2 + $0x110] sm:$0xff]
      %v364 = vld [vmem:[#allocation2 + $0x118] sm:$0xff]
      %v365 = vld [vmem:[#allocation2 + $0x120] sm:$0xff]
      %v366 = vld [vmem:[#allocation2 + $0x128] sm:$0xff]
      %v367 = vld [vmem:[#allocation2 + $0x130] sm:$0xff]
      %v368 = vld [vmem:[#allocation2 + $0x138] sm:$0xff]
      %v369 = vld [vmem:[#allocation2 + $0x140] sm:$0xff]
      %v370 = vld [vmem:[#allocation2 + $0x148] sm:$0xff]
      %v371 = vld [vmem:[#allocation2 + $0x150] sm:$0xff]
      %v372 = vld [vmem:[#allocation2 + $0x158] sm:$0xff]
      %v373 = vld [vmem:[#allocation2 + $0x160] sm:$0xff]
      %v374 = vld [vmem:[#allocation2 + $0x168] sm:$0xff]
      %v375 = vld [vmem:[#allocation2 + $0x170] sm:$0xff]
      %v376 = vld [vmem:[#allocation2 + $0x178] sm:$0xff]
      %v377 = vld [vmem:[#allocation2 + $0x180] sm:$0xff]
      %v378 = vld [vmem:[#allocation2 + $0x188] sm:$0xff]
      %v379 = vld [vmem:[#allocation2 + $0x190] sm:$0xff]
      %v380 = vld [vmem:[#allocation2 + $0x198] sm:$0xff]
      %v381 = vld [vmem:[#allocation2 + $0x1a0] sm:$0xff]
      %v382 = vld [vmem:[#allocation2 + $0x1a8] sm:$0xff]
      %v383 = vld [vmem:[#allocation2 + $0x1b0] sm:$0xff]
      %v384 = vld [vmem:[#allocation2 + $0x1b8] sm:$0xff]
      %v385 = vld [vmem:[#allocation2 + $0x1c0] sm:$0xff]
      %v386 = vld [vmem:[#allocation2 + $0x1c8] sm:$0xff]
      %v387 = vld [vmem:[#allocation2 + $0x1d0] sm:$0xff]
      %v388 = vld [vmem:[#allocation2 + $0x1d8] sm:$0xff]
      %v389 = vld [vmem:[#allocation2 + $0x1e0] sm:$0xff]
      %v390 = vld [vmem:[#allocation2 + $0x1e8] sm:$0xff]
      %v391 = vld [vmem:[#allocation2 + $0x1f0] sm:$0xff]
      %v392 = vld [vmem:[#allocation2 + $0x1f8] sm:$0xff]
      %v393 = vld [vmem:[%s236] sm:$0xf]
      %v394 = vld [vmem:[%s236 + $0x4] sm:$0xf]
      %v395 = vld [vmem:[%s236 + $0x8] sm:$0xf]
      %v396 = vld [vmem:[%s236 + $0xc] sm:$0xf]
      %v397 = vld [vmem:[%s236 + $0x10] sm:$0xf]
      %v398 = vld [vmem:[%s236 + $0x14] sm:$0xf]
      %v399 = vld [vmem:[%s236 + $0x18] sm:$0xf]
      %v400 = vld [vmem:[%s236 + $0x1c] sm:$0xf]
      %v401 = vld [vmem:[%s236 + $0x20] sm:$0xf]
      %v402 = vld [vmem:[%s236 + $0x24] sm:$0xf]
      %v403 = vld [vmem:[%s236 + $0x28] sm:$0xf]
      %v404 = vld [vmem:[%s236 + $0x2c] sm:$0xf]
      %v405 = vld [vmem:[%s236 + $0x30] sm:$0xf]
      %v406 = vld [vmem:[%s236 + $0x34] sm:$0xf]
      %v407 = vld [vmem:[%s236 + $0x38] sm:$0xf]
      %v408 = vld [vmem:[%s236 + $0x3c] sm:$0xf]
      %v409 = vld [vmem:[%s236 + $0x40] sm:$0xf]
      %v410 = vld [vmem:[%s236 + $0x44] sm:$0xf]
      %v411 = vld [vmem:[%s236 + $0x48] sm:$0xf]
      %v412 = vld [vmem:[%s236 + $0x4c] sm:$0xf]
      %v413 = vld [vmem:[%s236 + $0x50] sm:$0xf]
      %v414 = vld [vmem:[%s236 + $0x54] sm:$0xf]
      %v415 = vld [vmem:[%s236 + $0x58] sm:$0xf]
      %v416 = vld [vmem:[%s236 + $0x5c] sm:$0xf]
      %v417 = vld [vmem:[%s236 + $0x60] sm:$0xf]
      %v418 = vld [vmem:[%s236 + $0x64] sm:$0xf]
      %v419 = vld [vmem:[%s236 + $0x68] sm:$0xf]
      %v420 = vld [vmem:[%s236 + $0x6c] sm:$0xf]
      %v421 = vld [vmem:[%s236 + $0x70] sm:$0xf]
      %v422 = vld [vmem:[%s236 + $0x74] sm:$0xf]
      %v423 = vld [vmem:[%s236 + $0x78] sm:$0xf]
      %v424 = vld [vmem:[%s236 + $0x7c] sm:$0xf]
      %v425 = vld [vmem:[%s236 + $0x80] sm:$0xf]
      %v426 = vld [vmem:[%s236 + $0x84] sm:$0xf]
      %v427 = vld [vmem:[%s236 + $0x88] sm:$0xf]
      %v428 = vld [vmem:[%s236 + $0x8c] sm:$0xf]
      %v429 = vld [vmem:[%s236 + $0x90] sm:$0xf]
      %v430 = vld [vmem:[%s236 + $0x94] sm:$0xf]
      %v431 = vld [vmem:[%s236 + $0x98] sm:$0xf]
      %v432 = vld [vmem:[%s236 + $0x9c] sm:$0xf]
      %v433 = vld [vmem:[%s236 + $0xa0] sm:$0xf]
      %v434 = vld [vmem:[%s236 + $0xa4] sm:$0xf]
      %v435 = vld [vmem:[%s236 + $0xa8] sm:$0xf]
      %v436 = vld [vmem:[%s236 + $0xac] sm:$0xf]
      %v437 = vld [vmem:[%s236 + $0xb0] sm:$0xf]
      %v438 = vld [vmem:[%s236 + $0xb4] sm:$0xf]
      %v439 = vld [vmem:[%s236 + $0xb8] sm:$0xf]
      %v440 = vld [vmem:[%s236 + $0xbc] sm:$0xf]
      %v441 = vld [vmem:[%s236 + $0xc0] sm:$0xf]
      %v442 = vld [vmem:[%s236 + $0xc4] sm:$0xf]
      %v443 = vld [vmem:[%s236 + $0xc8] sm:$0xf]
      %v444 = vld [vmem:[%s236 + $0xcc] sm:$0xf]
      %v445 = vld [vmem:[%s236 + $0xd0] sm:$0xf]
      %v446 = vld [vmem:[%s236 + $0xd4] sm:$0xf]
      %v447 = vld [vmem:[%s236 + $0xd8] sm:$0xf]
      %v448 = vld [vmem:[%s236 + $0xdc] sm:$0xf]
      %v449 = vld [vmem:[%s236 + $0xe0] sm:$0xf]
      %v450 = vld [vmem:[%s236 + $0xe4] sm:$0xf]
      %v451 = vld [vmem:[%s236 + $0xe8] sm:$0xf]
      %v452 = vld [vmem:[%s236 + $0xec] sm:$0xf]
      %v453 = vld [vmem:[%s236 + $0xf0] sm:$0xf]
      %v454 = vld [vmem:[%s236 + $0xf4] sm:$0xf]
      %v455 = vld [vmem:[%s236 + $0xf8] sm:$0xf]
      %v456 = vld [vmem:[%s236 + $0xfc] sm:$0xf]
      %v457 = vld [vmem:[%s245] sm:$0xf]
      %v458 = vld [vmem:[%s245 + $0x4] sm:$0xf]
      %v459 = vld [vmem:[%s245 + $0x8] sm:$0xf]
      %v460 = vld [vmem:[%s245 + $0xc] sm:$0xf]
      %v525 = vunpack.c.l.b16 %v393
      %v526 = vunpack.c.l.b16 %v394
      %v527 = vunpack.c.l.b16 %v395
      %v528 = vunpack.c.l.b16 %v396
      %v529 = vunpack.c.l.b16 %v397
      %v530 = vunpack.c.l.b16 %v398
      %v531 = vunpack.c.l.b16 %v399
      %v532 = vunpack.c.l.b16 %v400
      %v533 = vunpack.c.l.b16 %v401
      %v534 = vunpack.c.l.b16 %v402
      %v535 = vunpack.c.l.b16 %v403
      %v536 = vunpack.c.l.b16 %v404
      %v537 = vunpack.c.l.b16 %v405
      %v538 = vunpack.c.l.b16 %v406
      %v539 = vunpack.c.l.b16 %v407
      %v540 = vunpack.c.l.b16 %v408
      %v541 = vunpack.c.l.b16 %v409
      %v542 = vunpack.c.l.b16 %v410
      %v543 = vunpack.c.l.b16 %v411
      %v544 = vunpack.c.l.b16 %v412
      %v545 = vunpack.c.l.b16 %v413
      %v546 = vunpack.c.l.b16 %v414
      %v547 = vunpack.c.l.b16 %v415
      %v548 = vunpack.c.l.b16 %v416
      %v549 = vunpack.c.l.b16 %v417
      %v550 = vunpack.c.l.b16 %v418
      %v551 = vunpack.c.l.b16 %v419
      %v552 = vunpack.c.l.b16 %v420
      %v553 = vunpack.c.l.b16 %v421
      %v554 = vunpack.c.l.b16 %v422
      %v555 = vunpack.c.l.b16 %v423
      %v556 = vunpack.c.l.b16 %v424
      %v557 = vunpack.c.l.b16 %v425
      %v558 = vunpack.c.l.b16 %v426
      %v559 = vunpack.c.l.b16 %v427
      %v560 = vunpack.c.l.b16 %v428
      %v561 = vunpack.c.l.b16 %v429
      %v562 = vunpack.c.l.b16 %v430
      %v563 = vunpack.c.l.b16 %v431
      %v564 = vunpack.c.l.b16 %v432
      %v565 = vunpack.c.l.b16 %v433
      %v566 = vunpack.c.l.b16 %v434
      %v567 = vunpack.c.l.b16 %v435
      %v568 = vunpack.c.l.b16 %v436
      %v569 = vunpack.c.l.b16 %v437
      %v570 = vunpack.c.l.b16 %v438
      %v571 = vunpack.c.l.b16 %v439
      %v572 = vunpack.c.l.b16 %v440
      %v573 = vunpack.c.l.b16 %v441
      %v574 = vunpack.c.l.b16 %v442
      %v575 = vunpack.c.l.b16 %v443
      %v576 = vunpack.c.l.b16 %v444
      %v577 = vunpack.c.l.b16 %v445
      %v578 = vunpack.c.l.b16 %v446
      %v579 = vunpack.c.l.b16 %v447
      %v580 = vunpack.c.l.b16 %v448
      %v581 = vunpack.c.l.b16 %v449
      %v582 = vunpack.c.l.b16 %v450
      %v583 = vunpack.c.l.b16 %v451
      %v584 = vunpack.c.l.b16 %v452
      %v585 = vunpack.c.l.b16 %v453
      %v586 = vunpack.c.l.b16 %v454
      %v587 = vunpack.c.l.b16 %v455
      %v588 = vunpack.c.l.b16 %v456
      %v589 = vpack.c.b16 %v526, %v525
      %v590 = vpack.c.b16 %v528, %v527
      %v591 = vpack.c.b16 %v530, %v529
      %v592 = vpack.c.b16 %v532, %v531
      %v593 = vpack.c.b16 %v534, %v533
      %v594 = vpack.c.b16 %v536, %v535
      %v595 = vpack.c.b16 %v538, %v537
      %v596 = vpack.c.b16 %v540, %v539
      %v597 = vpack.c.b16 %v542, %v541
      %v598 = vpack.c.b16 %v544, %v543
      %v599 = vpack.c.b16 %v546, %v545
      %v600 = vpack.c.b16 %v548, %v547
      %v601 = vpack.c.b16 %v550, %v549
      %v602 = vpack.c.b16 %v552, %v551
      %v603 = vpack.c.b16 %v554, %v553
      %v604 = vpack.c.b16 %v556, %v555
      %v605 = vpack.c.b16 %v558, %v557
      %v606 = vpack.c.b16 %v560, %v559
      %v607 = vpack.c.b16 %v562, %v561
      %v608 = vpack.c.b16 %v564, %v563
      %v609 = vpack.c.b16 %v566, %v565
      %v610 = vpack.c.b16 %v568, %v567
      %v611 = vpack.c.b16 %v570, %v569
      %v612 = vpack.c.b16 %v572, %v571
      %v613 = vpack.c.b16 %v574, %v573
      %v614 = vpack.c.b16 %v576, %v575
      %v615 = vpack.c.b16 %v578, %v577
      %v616 = vpack.c.b16 %v580, %v579
      %v617 = vpack.c.b16 %v582, %v581
      %v618 = vpack.c.b16 %v584, %v583
      %v619 = vpack.c.b16 %v586, %v585
      %v620 = vpack.c.b16 %v588, %v587
      %v625 = vunpack.c.l.b16 %v457
      %v626 = vunpack.c.l.b16 %v458
      %v627 = vunpack.c.l.b16 %v459
      %v628 = vunpack.c.l.b16 %v460
      %v629 = vpack.c.b16 %v626, %v625
      %v630 = vpack.c.b16 %v628, %v627
      %vm633 = vcmask 261120
      %v635 = vsel %vm633, %v589, 0
      %v638 = vsel %vm633, %v590, 0
      %v641 = vsel %vm633, %v591, 0
      %v644 = vsel %vm633, %v592, 0
      %v647 = vsel %vm633, %v593, 0
      %v650 = vsel %vm633, %v594, 0
      %v653 = vsel %vm633, %v595, 0
      %v656 = vsel %vm633, %v596, 0
      %v659 = vsel %vm633, %v597, 0
      %v662 = vsel %vm633, %v598, 0
      %v665 = vsel %vm633, %v599, 0
      %v668 = vsel %vm633, %v600, 0
      %v671 = vsel %vm633, %v601, 0
      %v674 = vsel %vm633, %v602, 0
      %v677 = vsel %vm633, %v603, 0
      %v680 = vsel %vm633, %v604, 0
      %v683 = vsel %vm633, %v605, 0
      %v686 = vsel %vm633, %v606, 0
      %v689 = vsel %vm633, %v607, 0
      %v692 = vsel %vm633, %v608, 0
      %v695 = vsel %vm633, %v609, 0
      %v698 = vsel %vm633, %v610, 0
      %v701 = vsel %vm633, %v611, 0
      %v704 = vsel %vm633, %v612, 0
      %v707 = vsel %vm633, %v613, 0
      %v710 = vsel %vm633, %v614, 0
      %v713 = vsel %vm633, %v615, 0
      %v716 = vsel %vm633, %v616, 0
      %v719 = vsel %vm633, %v617, 0
      %v722 = vsel %vm633, %v618, 0
      %v725 = vsel %vm633, %v619, 0
      %v728 = vsel %vm633, %v620, 0
      %730 = vmatpush.bf16.msra.mxu0 0
      %731 = vmatpush.bf16.msra.mxu0 0
      %732 = vmatpush.bf16.msra.mxu0 0
      %733 = vmatpush.bf16.msra.mxu0 0
      %734 = vmatpush.bf16.msra.mxu0 0
      %735 = vmatpush.bf16.msra.mxu0 0
      %736 = vmatpush.bf16.msra.mxu0 %v630
      %737 = vmatpush.bf16.msra.mxu0 %v629
      %738 = vmatmul.bf16.gmra.mxu0 %v635
      %v739 = vpop.f32.mrf.mxu0
      %v740 = vadd.f32 0.0, %v739
      %v741 = vpop.f32.mrf.mxu0
      %v742 = vadd.f32 0.0, %v741
      %743 = vmatmul.bf16.gmra.mxu0 %v638
      %v744 = vpop.f32.mrf.mxu0
      %v745 = vadd.f32 0.0, %v744
      %v746 = vpop.f32.mrf.mxu0
      %v747 = vadd.f32 0.0, %v746
      %748 = vmatmul.bf16.gmra.mxu0 %v641
      %v749 = vpop.f32.mrf.mxu0
      %v750 = vadd.f32 0.0, %v749
      %v751 = vpop.f32.mrf.mxu0
      %v752 = vadd.f32 0.0, %v751
      %753 = vmatmul.bf16.gmra.mxu0 %v644
      %v754 = vpop.f32.mrf.mxu0
      %v755 = vadd.f32 0.0, %v754
      %v756 = vpop.f32.mrf.mxu0
      %v757 = vadd.f32 0.0, %v756
      %758 = vmatmul.bf16.gmra.mxu0 %v647
      %v759 = vpop.f32.mrf.mxu0
      %v760 = vadd.f32 0.0, %v759
      %v761 = vpop.f32.mrf.mxu0
      %v762 = vadd.f32 0.0, %v761
      %763 = vmatmul.bf16.gmra.mxu0 %v650
      %v764 = vpop.f32.mrf.mxu0
      %v765 = vadd.f32 0.0, %v764
      %v766 = vpop.f32.mrf.mxu0
      %v767 = vadd.f32 0.0, %v766
      %768 = vmatmul.bf16.gmra.mxu0 %v653
      %v769 = vpop.f32.mrf.mxu0
      %v770 = vadd.f32 0.0, %v769
      %v771 = vpop.f32.mrf.mxu0
      %v772 = vadd.f32 0.0, %v771
      %773 = vmatmul.bf16.gmra.mxu0 %v656
      %v774 = vpop.f32.mrf.mxu0
      %v775 = vadd.f32 0.0, %v774
      %v776 = vpop.f32.mrf.mxu0
      %v777 = vadd.f32 0.0, %v776
      %778 = vmatmul.bf16.gmra.mxu0 %v659
      %v779 = vpop.f32.mrf.mxu0
      %v780 = vadd.f32 0.0, %v779
      %v781 = vpop.f32.mrf.mxu0
      %v782 = vadd.f32 0.0, %v781
      %783 = vmatmul.bf16.gmra.mxu0 %v662
      %v784 = vpop.f32.mrf.mxu0
      %v785 = vadd.f32 0.0, %v784
      %v786 = vpop.f32.mrf.mxu0
      %v787 = vadd.f32 0.0, %v786
      %788 = vmatmul.bf16.gmra.mxu0 %v665
      %v789 = vpop.f32.mrf.mxu0
      %v790 = vadd.f32 0.0, %v789
      %v791 = vpop.f32.mrf.mxu0
      %v792 = vadd.f32 0.0, %v791
      %793 = vmatmul.bf16.gmra.mxu0 %v668
      %v794 = vpop.f32.mrf.mxu0
      %v795 = vadd.f32 0.0, %v794
      %v796 = vpop.f32.mrf.mxu0
      %v797 = vadd.f32 0.0, %v796
      %798 = vmatmul.bf16.gmra.mxu0 %v671
      %v799 = vpop.f32.mrf.mxu0
      %v800 = vadd.f32 0.0, %v799
      %v801 = vpop.f32.mrf.mxu0
      %v802 = vadd.f32 0.0, %v801
      %803 = vmatmul.bf16.gmra.mxu0 %v674
      %v804 = vpop.f32.mrf.mxu0
      %v805 = vadd.f32 0.0, %v804
      %v806 = vpop.f32.mrf.mxu0
      %v807 = vadd.f32 0.0, %v806
      %808 = vmatmul.bf16.gmra.mxu0 %v677
      %v809 = vpop.f32.mrf.mxu0
      %v810 = vadd.f32 0.0, %v809
      %v811 = vpop.f32.mrf.mxu0
      %v812 = vadd.f32 0.0, %v811
      %813 = vmatmul.bf16.gmra.mxu0 %v680
      %v814 = vpop.f32.mrf.mxu0
      %v815 = vadd.f32 0.0, %v814
      %v816 = vpop.f32.mrf.mxu0
      %v817 = vadd.f32 0.0, %v816
      %818 = vmatmul.bf16.gmra.mxu0 %v683
      %v819 = vpop.f32.mrf.mxu0
      %v820 = vadd.f32 0.0, %v819
      %v821 = vpop.f32.mrf.mxu0
      %v822 = vadd.f32 0.0, %v821
      %823 = vmatmul.bf16.gmra.mxu0 %v686
      %v824 = vpop.f32.mrf.mxu0
      %v825 = vadd.f32 0.0, %v824
      %v826 = vpop.f32.mrf.mxu0
      %v827 = vadd.f32 0.0, %v826
      %828 = vmatmul.bf16.gmra.mxu0 %v689
      %v829 = vpop.f32.mrf.mxu0
      %v830 = vadd.f32 0.0, %v829
      %v831 = vpop.f32.mrf.mxu0
      %v832 = vadd.f32 0.0, %v831
      %833 = vmatmul.bf16.gmra.mxu0 %v692
      %v834 = vpop.f32.mrf.mxu0
      %v835 = vadd.f32 0.0, %v834
      %v836 = vpop.f32.mrf.mxu0
      %v837 = vadd.f32 0.0, %v836
      %838 = vmatmul.bf16.gmra.mxu0 %v695
      %v839 = vpop.f32.mrf.mxu0
      %v840 = vadd.f32 0.0, %v839
      %v841 = vpop.f32.mrf.mxu0
      %v842 = vadd.f32 0.0, %v841
      %843 = vmatmul.bf16.gmra.mxu0 %v698
      %v844 = vpop.f32.mrf.mxu0
      %v845 = vadd.f32 0.0, %v844
      %v846 = vpop.f32.mrf.mxu0
      %v847 = vadd.f32 0.0, %v846
      %848 = vmatmul.bf16.gmra.mxu0 %v701
      %v849 = vpop.f32.mrf.mxu0
      %v850 = vadd.f32 0.0, %v849
      %v851 = vpop.f32.mrf.mxu0
      %v852 = vadd.f32 0.0, %v851
      %853 = vmatmul.bf16.gmra.mxu0 %v704
      %v854 = vpop.f32.mrf.mxu0
      %v855 = vadd.f32 0.0, %v854
      %v856 = vpop.f32.mrf.mxu0
      %v857 = vadd.f32 0.0, %v856
      %858 = vmatmul.bf16.gmra.mxu0 %v707
      %v859 = vpop.f32.mrf.mxu0
      %v860 = vadd.f32 0.0, %v859
      %v861 = vpop.f32.mrf.mxu0
      %v862 = vadd.f32 0.0, %v861
      %863 = vmatmul.bf16.gmra.mxu0 %v710
      %v864 = vpop.f32.mrf.mxu0
      %v865 = vadd.f32 0.0, %v864
      %v866 = vpop.f32.mrf.mxu0
      %v867 = vadd.f32 0.0, %v866
      %868 = vmatmul.bf16.gmra.mxu0 %v713
      %v869 = vpop.f32.mrf.mxu0
      %v870 = vadd.f32 0.0, %v869
      %v871 = vpop.f32.mrf.mxu0
      %v872 = vadd.f32 0.0, %v871
      %873 = vmatmul.bf16.gmra.mxu0 %v716
      %v874 = vpop.f32.mrf.mxu0
      %v875 = vadd.f32 0.0, %v874
      %v876 = vpop.f32.mrf.mxu0
      %v877 = vadd.f32 0.0, %v876
      %878 = vmatmul.bf16.gmra.mxu0 %v719
      %v879 = vpop.f32.mrf.mxu0
      %v880 = vadd.f32 0.0, %v879
      %v881 = vpop.f32.mrf.mxu0
      %v882 = vadd.f32 0.0, %v881
      %883 = vmatmul.bf16.gmra.mxu0 %v722
      %v884 = vpop.f32.mrf.mxu0
      %v885 = vadd.f32 0.0, %v884
      %v886 = vpop.f32.mrf.mxu0
      %v887 = vadd.f32 0.0, %v886
      %888 = vmatmul.bf16.gmra.mxu0 %v725
      %v889 = vpop.f32.mrf.mxu0
      %v890 = vadd.f32 0.0, %v889
      %v891 = vpop.f32.mrf.mxu0
      %v892 = vadd.f32 0.0, %v891
      %893 = vmatmul.bf16.gmra.mxu0 %v728
      %v894 = vpop.f32.mrf.mxu0
      %v895 = vadd.f32 0.0, %v894
      %v896 = vpop.f32.mrf.mxu0
      %v897 = vadd.f32 0.0, %v896
      %898 = vdwg.mxu0
      %v899 = vadd.f32 %v329, %v740
      %v900 = vadd.f32 %v330, %v742
      %v901 = vadd.f32 %v331, %v745
      %v902 = vadd.f32 %v332, %v747
      %v903 = vadd.f32 %v333, %v750
      %v904 = vadd.f32 %v334, %v752
      %v905 = vadd.f32 %v335, %v755
      %v906 = vadd.f32 %v336, %v757
      %v907 = vadd.f32 %v337, %v760
      %v908 = vadd.f32 %v338, %v762
      %v909 = vadd.f32 %v339, %v765
      %v910 = vadd.f32 %v340, %v767
      %v911 = vadd.f32 %v341, %v770
      %v912 = vadd.f32 %v342, %v772
      %v913 = vadd.f32 %v343, %v775
      %v914 = vadd.f32 %v344, %v777
      %v915 = vadd.f32 %v345, %v780
      %v916 = vadd.f32 %v346, %v782
      %v917 = vadd.f32 %v347, %v785
      %v918 = vadd.f32 %v348, %v787
      %v919 = vadd.f32 %v349, %v790
      %v920 = vadd.f32 %v350, %v792
      %v921 = vadd.f32 %v351, %v795
      %v922 = vadd.f32 %v352, %v797
      %v923 = vadd.f32 %v353, %v800
      %v924 = vadd.f32 %v354, %v802
      %v925 = vadd.f32 %v355, %v805
      %v926 = vadd.f32 %v356, %v807
      %v927 = vadd.f32 %v357, %v810
      %v928 = vadd.f32 %v358, %v812
      %v929 = vadd.f32 %v359, %v815
      %v930 = vadd.f32 %v360, %v817
      %v931 = vadd.f32 %v361, %v820
      %v932 = vadd.f32 %v362, %v822
      %v933 = vadd.f32 %v363, %v825
      %v934 = vadd.f32 %v364, %v827
      %v935 = vadd.f32 %v365, %v830
      %v936 = vadd.f32 %v366, %v832
      %v937 = vadd.f32 %v367, %v835
      %v938 = vadd.f32 %v368, %v837
      %v939 = vadd.f32 %v369, %v840
      %v940 = vadd.f32 %v370, %v842
      %v941 = vadd.f32 %v371, %v845
      %v942 = vadd.f32 %v372, %v847
      %v943 = vadd.f32 %v373, %v850
      %v944 = vadd.f32 %v374, %v852
      %v945 = vadd.f32 %v375, %v855
      %v946 = vadd.f32 %v376, %v857
      %v947 = vadd.f32 %v377, %v860
      %v948 = vadd.f32 %v378, %v862
      %v949 = vadd.f32 %v379, %v865
      %v950 = vadd.f32 %v380, %v867
      %v951 = vadd.f32 %v381, %v870
      %v952 = vadd.f32 %v382, %v872
      %v953 = vadd.f32 %v383, %v875
      %v954 = vadd.f32 %v384, %v877
      %v955 = vadd.f32 %v385, %v880
      %v956 = vadd.f32 %v386, %v882
      %v957 = vadd.f32 %v387, %v885
      %v958 = vadd.f32 %v388, %v887
      %v959 = vadd.f32 %v389, %v890
      %v960 = vadd.f32 %v390, %v892
      %v961 = vadd.f32 %v391, %v895
      %v962 = vadd.f32 %v392, %v897
      %vm963 = vcmask 523264
      %964 = vst.msk [vmem:[#allocation2] sm:$0xff] %vm963, %v899
      %965 = vst.msk [vmem:[#allocation2 + $0x8] sm:$0xff] %vm963, %v900
      %966 = vst.msk [vmem:[#allocation2 + $0x10] sm:$0xff] %vm963, %v901
      %967 = vst.msk [vmem:[#allocation2 + $0x18] sm:$0xff] %vm963, %v902
      %968 = vst.msk [vmem:[#allocation2 + $0x20] sm:$0xff] %vm963, %v903
      %969 = vst.msk [vmem:[#allocation2 + $0x28] sm:$0xff] %vm963, %v904
      %970 = vst.msk [vmem:[#allocation2 + $0x30] sm:$0xff] %vm963, %v905
      %971 = vst.msk [vmem:[#allocation2 + $0x38] sm:$0xff] %vm963, %v906
      %972 = vst.msk [vmem:[#allocation2 + $0x40] sm:$0xff] %vm963, %v907
      %973 = vst.msk [vmem:[#allocation2 + $0x48] sm:$0xff] %vm963, %v908
      %974 = vst.msk [vmem:[#allocation2 + $0x50] sm:$0xff] %vm963, %v909
      %975 = vst.msk [vmem:[#allocation2 + $0x58] sm:$0xff] %vm963, %v910
      %976 = vst.msk [vmem:[#allocation2 + $0x60] sm:$0xff] %vm963, %v911
      %977 = vst.msk [vmem:[#allocation2 + $0x68] sm:$0xff] %vm963, %v912
      %978 = vst.msk [vmem:[#allocation2 + $0x70] sm:$0xff] %vm963, %v913
      %979 = vst.msk [vmem:[#allocation2 + $0x78] sm:$0xff] %vm963, %v914
      %980 = vst.msk [vmem:[#allocation2 + $0x80] sm:$0xff] %vm963, %v915
      %981 = vst.msk [vmem:[#allocation2 + $0x88] sm:$0xff] %vm963, %v916
      %982 = vst.msk [vmem:[#allocation2 + $0x90] sm:$0xff] %vm963, %v917
      %983 = vst.msk [vmem:[#allocation2 + $0x98] sm:$0xff] %vm963, %v918
      %984 = vst.msk [vmem:[#allocation2 + $0xa0] sm:$0xff] %vm963, %v919
      %985 = vst.msk [vmem:[#allocation2 + $0xa8] sm:$0xff] %vm963, %v920
      %986 = vst.msk [vmem:[#allocation2 + $0xb0] sm:$0xff] %vm963, %v921
      %987 = vst.msk [vmem:[#allocation2 + $0xb8] sm:$0xff] %vm963, %v922
      %988 = vst.msk [vmem:[#allocation2 + $0xc0] sm:$0xff] %vm963, %v923
      %989 = vst.msk [vmem:[#allocation2 + $0xc8] sm:$0xff] %vm963, %v924
      %990 = vst.msk [vmem:[#allocation2 + $0xd0] sm:$0xff] %vm963, %v925
      %991 = vst.msk [vmem:[#allocation2 + $0xd8] sm:$0xff] %vm963, %v926
      %992 = vst.msk [vmem:[#allocation2 + $0xe0] sm:$0xff] %vm963, %v927
      %993 = vst.msk [vmem:[#allocation2 + $0xe8] sm:$0xff] %vm963, %v928
      %994 = vst.msk [vmem:[#allocation2 + $0xf0] sm:$0xff] %vm963, %v929
      %995 = vst.msk [vmem:[#allocation2 + $0xf8] sm:$0xff] %vm963, %v930
      %996 = vst.msk [vmem:[#allocation2 + $0x100] sm:$0xff] %vm963, %v931
      %997 = vst.msk [vmem:[#allocation2 + $0x108] sm:$0xff] %vm963, %v932
      %998 = vst.msk [vmem:[#allocation2 + $0x110] sm:$0xff] %vm963, %v933
      %999 = vst.msk [vmem:[#allocation2 + $0x118] sm:$0xff] %vm963, %v934
      %1000 = vst.msk [vmem:[#allocation2 + $0x120] sm:$0xff] %vm963, %v935
      %1001 = vst.msk [vmem:[#allocation2 + $0x128] sm:$0xff] %vm963, %v936
      %1002 = vst.msk [vmem:[#allocation2 + $0x130] sm:$0xff] %vm963, %v937
      %1003 = vst.msk [vmem:[#allocation2 + $0x138] sm:$0xff] %vm963, %v938
      %1004 = vst.msk [vmem:[#allocation2 + $0x140] sm:$0xff] %vm963, %v939
      %1005 = vst.msk [vmem:[#allocation2 + $0x148] sm:$0xff] %vm963, %v940
      %1006 = vst.msk [vmem:[#allocation2 + $0x150] sm:$0xff] %vm963, %v941
      %1007 = vst.msk [vmem:[#allocation2 + $0x158] sm:$0xff] %vm963, %v942
      %1008 = vst.msk [vmem:[#allocation2 + $0x160] sm:$0xff] %vm963, %v943
      %1009 = vst.msk [vmem:[#allocation2 + $0x168] sm:$0xff] %vm963, %v944
      %1010 = vst.msk [vmem:[#allocation2 + $0x170] sm:$0xff] %vm963, %v945
      %1011 = vst.msk [vmem:[#allocation2 + $0x178] sm:$0xff] %vm963, %v946
      %1012 = vst.msk [vmem:[#allocation2 + $0x180] sm:$0xff] %vm963, %v947
      %1013 = vst.msk [vmem:[#allocation2 + $0x188] sm:$0xff] %vm963, %v948
      %1014 = vst.msk [vmem:[#allocation2 + $0x190] sm:$0xff] %vm963, %v949
      %1015 = vst.msk [vmem:[#allocation2 + $0x198] sm:$0xff] %vm963, %v950
      %1016 = vst.msk [vmem:[#allocation2 + $0x1a0] sm:$0xff] %vm963, %v951
      %1017 = vst.msk [vmem:[#allocation2 + $0x1a8] sm:$0xff] %vm963, %v952
      %1018 = vst.msk [vmem:[#allocation2 + $0x1b0] sm:$0xff] %vm963, %v953
      %1019 = vst.msk [vmem:[#allocation2 + $0x1b8] sm:$0xff] %vm963, %v954
      %1020 = vst.msk [vmem:[#allocation2 + $0x1c0] sm:$0xff] %vm963, %v955
      %1021 = vst.msk [vmem:[#allocation2 + $0x1c8] sm:$0xff] %vm963, %v956
      %1022 = vst.msk [vmem:[#allocation2 + $0x1d0] sm:$0xff] %vm963, %v957
      %1023 = vst.msk [vmem:[#allocation2 + $0x1d8] sm:$0xff] %vm963, %v958
      %1024 = vst.msk [vmem:[#allocation2 + $0x1e0] sm:$0xff] %vm963, %v959
      %1025 = vst.msk [vmem:[#allocation2 + $0x1e8] sm:$0xff] %vm963, %v960
      %1026 = vst.msk [vmem:[#allocation2 + $0x1f0] sm:$0xff] %vm963, %v961
      %1027 = vst.msk [vmem:[#allocation2 + $0x1f8] sm:$0xff] %vm963, %v962
      // Predicated region
      $region37: #{matmul_bias_act.1} parent=31 // pred_check
        %p1028 = pneg %p260
      $region38: #{matmul_bias_act.1} parent=31 // pred_check_branch
        %1030 = sbr.rel (%p1028) target = $region40
      $region39: #{matmul_bias_act.1} parent=31 // pred_region
        %v1031 = vld [vmem:[#allocation2] sm:$0xff]
        %v1032 = vld [vmem:[#allocation2 + $0x8] sm:$0xff]
        %v1033 = vld [vmem:[#allocation2 + $0x10] sm:$0xff]
        %v1034 = vld [vmem:[#allocation2 + $0x18] sm:$0xff]
        %v1035 = vld [vmem:[#allocation2 + $0x20] sm:$0xff]
        %v1036 = vld [vmem:[#allocation2 + $0x28] sm:$0xff]
        %v1037 = vld [vmem:[#allocation2 + $0x30] sm:$0xff]
        %v1038 = vld [vmem:[#allocation2 + $0x38] sm:$0xff]
        %v1039 = vld [vmem:[#allocation2 + $0x40] sm:$0xff]
        %v1040 = vld [vmem:[#allocation2 + $0x48] sm:$0xff]
        %v1041 = vld [vmem:[#allocation2 + $0x50] sm:$0xff]
        %v1042 = vld [vmem:[#allocation2 + $0x58] sm:$0xff]
        %v1043 = vld [vmem:[#allocation2 + $0x60] sm:$0xff]
        %v1044 = vld [vmem:[#allocation2 + $0x68] sm:$0xff]
        %v1045 = vld [vmem:[#allocation2 + $0x70] sm:$0xff]
        %v1046 = vld [vmem:[#allocation2 + $0x78] sm:$0xff]
        %v1047 = vld [vmem:[#allocation2 + $0x80] sm:$0xff]
        %v1048 = vld [vmem:[#allocation2 + $0x88] sm:$0xff]
        %v1049 = vld [vmem:[#allocation2 + $0x90] sm:$0xff]
        %v1050 = vld [vmem:[#allocation2 + $0x98] sm:$0xff]
        %v1051 = vld [vmem:[#allocation2 + $0xa0] sm:$0xff]
        %v1052 = vld [vmem:[#allocation2 + $0xa8] sm:$0xff]
        %v1053 = vld [vmem:[#allocation2 + $0xb0] sm:$0xff]
        %v1054 = vld [vmem:[#allocation2 + $0xb8] sm:$0xff]
        %v1055 = vld [vmem:[#allocation2 + $0xc0] sm:$0xff]
        %v1056 = vld [vmem:[#allocation2 + $0xc8] sm:$0xff]
        %v1057 = vld [vmem:[#allocation2 + $0xd0] sm:$0xff]
        %v1058 = vld [vmem:[#allocation2 + $0xd8] sm:$0xff]
        %v1059 = vld [vmem:[#allocation2 + $0xe0] sm:$0xff]
        %v1060 = vld [vmem:[#allocation2 + $0xe8] sm:$0xff]
        %v1061 = vld [vmem:[#allocation2 + $0xf0] sm:$0xff]
        %v1062 = vld [vmem:[#allocation2 + $0xf8] sm:$0xff]
        %v1063 = vld [vmem:[#allocation2 + $0x100] sm:$0xff]
        %v1064 = vld [vmem:[#allocation2 + $0x108] sm:$0xff]
        %v1065 = vld [vmem:[#allocation2 + $0x110] sm:$0xff]
        %v1066 = vld [vmem:[#allocation2 + $0x118] sm:$0xff]
        %v1067 = vld [vmem:[#allocation2 + $0x120] sm:$0xff]
        %v1068 = vld [vmem:[#allocation2 + $0x128] sm:$0xff]
        %v1069 = vld [vmem:[#allocation2 + $0x130] sm:$0xff]
        %v1070 = vld [vmem:[#allocation2 + $0x138] sm:$0xff]
        %v1071 = vld [vmem:[#allocation2 + $0x140] sm:$0xff]
        %v1072 = vld [vmem:[#allocation2 + $0x148] sm:$0xff]
        %v1073 = vld [vmem:[#allocation2 + $0x150] sm:$0xff]
        %v1074 = vld [vmem:[#allocation2 + $0x158] sm:$0xff]
        %v1075 = vld [vmem:[#allocation2 + $0x160] sm:$0xff]
        %v1076 = vld [vmem:[#allocation2 + $0x168] sm:$0xff]
        %v1077 = vld [vmem:[#allocation2 + $0x170] sm:$0xff]
        %v1078 = vld [vmem:[#allocation2 + $0x178] sm:$0xff]
        %v1079 = vld [vmem:[#allocation2 + $0x180] sm:$0xff]
        %v1080 = vld [vmem:[#allocation2 + $0x188] sm:$0xff]
        %v1081 = vld [vmem:[#allocation2 + $0x190] sm:$0xff]
        %v1082 = vld [vmem:[#allocation2 + $0x198] sm:$0xff]
        %v1083 = vld [vmem:[#allocation2 + $0x1a0] sm:$0xff]
        %v1084 = vld [vmem:[#allocation2 + $0x1a8] sm:$0xff]
        %v1085 = vld [vmem:[#allocation2 + $0x1b0] sm:$0xff]
        %v1086 = vld [vmem:[#allocation2 + $0x1b8] sm:$0xff]
        %v1087 = vld [vmem:[#allocation2 + $0x1c0] sm:$0xff]
        %v1088 = vld [vmem:[#allocation2 + $0x1c8] sm:$0xff]
        %v1089 = vld [vmem:[#allocation2 + $0x1d0] sm:$0xff]
        %v1090 = vld [vmem:[#allocation2 + $0x1d8] sm:$0xff]
        %v1091 = vld [vmem:[#allocation2 + $0x1e0] sm:$0xff]
        %v1092 = vld [vmem:[#allocation2 + $0x1e8] sm:$0xff]
        %v1093 = vld [vmem:[#allocation2 + $0x1f0] sm:$0xff]
        %v1094 = vld [vmem:[#allocation2 + $0x1f8] sm:$0xff]
        %v1095 = vld [vmem:[%s249] sm:$0x1]
        %v1097 = vperm.slane %v1095, 0
        %v1099 = vadd.f32 %v1031, %v1097
        %v1100 = vadd.f32 %v1032, %v1097
        %v1101 = vadd.f32 %v1033, %v1097
        %v1102 = vadd.f32 %v1034, %v1097
        %v1103 = vadd.f32 %v1035, %v1097
        %v1104 = vadd.f32 %v1036, %v1097
        %v1105 = vadd.f32 %v1037, %v1097
        %v1106 = vadd.f32 %v1038, %v1097
        %v1107 = vadd.f32 %v1039, %v1097
        %v1108 = vadd.f32 %v1040, %v1097
        %v1109 = vadd.f32 %v1041, %v1097
        %v1110 = vadd.f32 %v1042, %v1097
        %v1111 = vadd.f32 %v1043, %v1097
        %v1112 = vadd.f32 %v1044, %v1097
        %v1113 = vadd.f32 %v1045, %v1097
        %v1114 = vadd.f32 %v1046, %v1097
        %v1115 = vadd.f32 %v1047, %v1097
        %v1116 = vadd.f32 %v1048, %v1097
        %v1117 = vadd.f32 %v1049, %v1097
        %v1118 = vadd.f32 %v1050, %v1097
        %v1119 = vadd.f32 %v1051, %v1097
        %v1120 = vadd.f32 %v1052, %v1097
        %v1121 = vadd.f32 %v1053, %v1097
        %v1122 = vadd.f32 %v1054, %v1097
        %v1123 = vadd.f32 %v1055, %v1097
        %v1124 = vadd.f32 %v1056, %v1097
        %v1125 = vadd.f32 %v1057, %v1097
        %v1126 = vadd.f32 %v1058, %v1097
        %v1127 = vadd.f32 %v1059, %v1097
        %v1128 = vadd.f32 %v1060, %v1097
        %v1129 = vadd.f32 %v1061, %v1097
        %v1130 = vadd.f32 %v1062, %v1097
        %v1131 = vadd.f32 %v1063, %v1097
        %v1132 = vadd.f32 %v1064, %v1097
        %v1133 = vadd.f32 %v1065, %v1097
        %v1134 = vadd.f32 %v1066, %v1097
        %v1135 = vadd.f32 %v1067, %v1097
        %v1136 = vadd.f32 %v1068, %v1097
        %v1137 = vadd.f32 %v1069, %v1097
        %v1138 = vadd.f32 %v1070, %v1097
        %v1139 = vadd.f32 %v1071, %v1097
        %v1140 = vadd.f32 %v1072, %v1097
        %v1141 = vadd.f32 %v1073, %v1097
        %v1142 = vadd.f32 %v1074, %v1097
        %v1143 = vadd.f32 %v1075, %v1097
        %v1144 = vadd.f32 %v1076, %v1097
        %v1145 = vadd.f32 %v1077, %v1097
        %v1146 = vadd.f32 %v1078, %v1097
        %v1147 = vadd.f32 %v1079, %v1097
        %v1148 = vadd.f32 %v1080, %v1097
        %v1149 = vadd.f32 %v1081, %v1097
        %v1150 = vadd.f32 %v1082, %v1097
        %v1151 = vadd.f32 %v1083, %v1097
        %v1152 = vadd.f32 %v1084, %v1097
        %v1153 = vadd.f32 %v1085, %v1097
        %v1154 = vadd.f32 %v1086, %v1097
        %v1155 = vadd.f32 %v1087, %v1097
        %v1156 = vadd.f32 %v1088, %v1097
        %v1157 = vadd.f32 %v1089, %v1097
        %v1158 = vadd.f32 %v1090, %v1097
        %v1159 = vadd.f32 %v1091, %v1097
        %v1160 = vadd.f32 %v1092, %v1097
        %v1161 = vadd.f32 %v1093, %v1097
        %v1162 = vadd.f32 %v1094, %v1097
        %v1163 = vmax.f32 %v1099, 0.0
        %v1164 = vmax.f32 %v1100, 0.0
        %v1165 = vmax.f32 %v1101, 0.0
        %v1166 = vmax.f32 %v1102, 0.0
        %v1167 = vmax.f32 %v1103, 0.0
        %v1168 = vmax.f32 %v1104, 0.0
        %v1169 = vmax.f32 %v1105, 0.0
        %v1170 = vmax.f32 %v1106, 0.0
        %v1171 = vmax.f32 %v1107, 0.0
        %v1172 = vmax.f32 %v1108, 0.0
        %v1173 = vmax.f32 %v1109, 0.0
        %v1174 = vmax.f32 %v1110, 0.0
        %v1175 = vmax.f32 %v1111, 0.0
        %v1176 = vmax.f32 %v1112, 0.0
        %v1177 = vmax.f32 %v1113, 0.0
        %v1178 = vmax.f32 %v1114, 0.0
        %v1179 = vmax.f32 %v1115, 0.0
        %v1180 = vmax.f32 %v1116, 0.0
        %v1181 = vmax.f32 %v1117, 0.0
        %v1182 = vmax.f32 %v1118, 0.0
        %v1183 = vmax.f32 %v1119, 0.0
        %v1184 = vmax.f32 %v1120, 0.0
        %v1185 = vmax.f32 %v1121, 0.0
        %v1186 = vmax.f32 %v1122, 0.0
        %v1187 = vmax.f32 %v1123, 0.0
        %v1188 = vmax.f32 %v1124, 0.0
        %v1189 = vmax.f32 %v1125, 0.0
        %v1190 = vmax.f32 %v1126, 0.0
        %v1191 = vmax.f32 %v1127, 0.0
        %v1192 = vmax.f32 %v1128, 0.0
        %v1193 = vmax.f32 %v1129, 0.0
        %v1194 = vmax.f32 %v1130, 0.0
        %v1195 = vmax.f32 %v1131, 0.0
        %v1196 = vmax.f32 %v1132, 0.0
        %v1197 = vmax.f32 %v1133, 0.0
        %v1198 = vmax.f32 %v1134, 0.0
        %v1199 = vmax.f32 %v1135, 0.0
        %v1200 = vmax.f32 %v1136, 0.0
        %v1201 = vmax.f32 %v1137, 0.0
        %v1202 = vmax.f32 %v1138, 0.0
        %v1203 = vmax.f32 %v1139, 0.0
        %v1204 = vmax.f32 %v1140, 0.0
        %v1205 = vmax.f32 %v1141, 0.0
        %v1206 = vmax.f32 %v1142, 0.0
        %v1207 = vmax.f32 %v1143, 0.0
        %v1208 = vmax.f32 %v1144, 0.0
        %v1209 = vmax.f32 %v1145, 0.0
        %v1210 = vmax.f32 %v1146, 0.0
        %v1211 = vmax.f32 %v1147, 0.0
        %v1212 = vmax.f32 %v1148, 0.0
        %v1213 = vmax.f32 %v1149, 0.0
        %v1214 = vmax.f32 %v1150, 0.0
        %v1215 = vmax.f32 %v1151, 0.0
        %v1216 = vmax.f32 %v1152, 0.0
        %v1217 = vmax.f32 %v1153, 0.0
        %v1218 = vmax.f32 %v1154, 0.0
        %v1219 = vmax.f32 %v1155, 0.0
        %v1220 = vmax.f32 %v1156, 0.0
        %v1221 = vmax.f32 %v1157, 0.0
        %v1222 = vmax.f32 %v1158, 0.0
        %v1223 = vmax.f32 %v1159, 0.0
        %v1224 = vmax.f32 %v1160, 0.0
        %v1225 = vmax.f32 %v1161, 0.0
        %v1226 = vmax.f32 %v1162, 0.0
        %v1227 = vpack.c.bf16 %v1163, %v1163
        %v1228 = vpack.c.bf16 %v1164, %v1164
        %v1229 = vpack.c.bf16 %v1165, %v1165
        %v1230 = vpack.c.bf16 %v1166, %v1166
        %v1231 = vpack.c.bf16 %v1167, %v1167
        %v1232 = vpack.c.bf16 %v1168, %v1168
        %v1233 = vpack.c.bf16 %v1169, %v1169
        %v1234 = vpack.c.bf16 %v1170, %v1170
        %v1235 = vpack.c.bf16 %v1171, %v1171
        %v1236 = vpack.c.bf16 %v1172, %v1172
        %v1237 = vpack.c.bf16 %v1173, %v1173
        %v1238 = vpack.c.bf16 %v1174, %v1174
        %v1239 = vpack.c.bf16 %v1175, %v1175
        %v1240 = vpack.c.bf16 %v1176, %v1176
        %v1241 = vpack.c.bf16 %v1177, %v1177
        %v1242 = vpack.c.bf16 %v1178, %v1178
        %v1243 = vpack.c.bf16 %v1179, %v1179
        %v1244 = vpack.c.bf16 %v1180, %v1180
        %v1245 = vpack.c.bf16 %v1181, %v1181
        %v1246 = vpack.c.bf16 %v1182, %v1182
        %v1247 = vpack.c.bf16 %v1183, %v1183
        %v1248 = vpack.c.bf16 %v1184, %v1184
        %v1249 = vpack.c.bf16 %v1185, %v1185
        %v1250 = vpack.c.bf16 %v1186, %v1186
        %v1251 = vpack.c.bf16 %v1187, %v1187
        %v1252 = vpack.c.bf16 %v1188, %v1188
        %v1253 = vpack.c.bf16 %v1189, %v1189
        %v1254 = vpack.c.bf16 %v1190, %v1190
        %v1255 = vpack.c.bf16 %v1191, %v1191
        %v1256 = vpack.c.bf16 %v1192, %v1192
        %v1257 = vpack.c.bf16 %v1193, %v1193
        %v1258 = vpack.c.bf16 %v1194, %v1194
        %v1259 = vpack.c.bf16 %v1195, %v1195
        %v1260 = vpack.c.bf16 %v1196, %v1196
        %v1261 = vpack.c.bf16 %v1197, %v1197
        %v1262 = vpack.c.bf16 %v1198, %v1198
        %v1263 = vpack.c.bf16 %v1199, %v1199
        %v1264 = vpack.c.bf16 %v1200, %v1200
        %v1265 = vpack.c.bf16 %v1201, %v1201
        %v1266 = vpack.c.bf16 %v1202, %v1202
        %v1267 = vpack.c.bf16 %v1203, %v1203
        %v1268 = vpack.c.bf16 %v1204, %v1204
        %v1269 = vpack.c.bf16 %v1205, %v1205
        %v1270 = vpack.c.bf16 %v1206, %v1206
        %v1271 = vpack.c.bf16 %v1207, %v1207
        %v1272 = vpack.c.bf16 %v1208, %v1208
        %v1273 = vpack.c.bf16 %v1209, %v1209
        %v1274 = vpack.c.bf16 %v1210, %v1210
        %v1275 = vpack.c.bf16 %v1211, %v1211
        %v1276 = vpack.c.bf16 %v1212, %v1212
        %v1277 = vpack.c.bf16 %v1213, %v1213
        %v1278 = vpack.c.bf16 %v1214, %v1214
        %v1279 = vpack.c.bf16 %v1215, %v1215
        %v1280 = vpack.c.bf16 %v1216, %v1216
        %v1281 = vpack.c.bf16 %v1217, %v1217
        %v1282 = vpack.c.bf16 %v1218, %v1218
        %v1283 = vpack.c.bf16 %v1219, %v1219
        %v1284 = vpack.c.bf16 %v1220, %v1220
        %v1285 = vpack.c.bf16 %v1221, %v1221
        %v1286 = vpack.c.bf16 %v1222, %v1222
        %v1287 = vpack.c.bf16 %v1223, %v1223
        %v1288 = vpack.c.bf16 %v1224, %v1224
        %v1289 = vpack.c.bf16 %v1225, %v1225
        %v1290 = vpack.c.bf16 %v1226, %v1226
        %vm1291 = vcmask 519168
        %1292 = vst.msk [vmem:[%s257] sm:$0xf] %vm1291, %v1227
        %1293 = vst.msk [vmem:[%s257 + $0x4] sm:$0xf] %vm1291, %v1228
        %1294 = vst.msk [vmem:[%s257 + $0x8] sm:$0xf] %vm1291, %v1229
        %1295 = vst.msk [vmem:[%s257 + $0xc] sm:$0xf] %vm1291, %v1230
        %1296 = vst.msk [vmem:[%s257 + $0x10] sm:$0xf] %vm1291, %v1231
        %1297 = vst.msk [vmem:[%s257 + $0x14] sm:$0xf] %vm1291, %v1232
        %1298 = vst.msk [vmem:[%s257 + $0x18] sm:$0xf] %vm1291, %v1233
        %1299 = vst.msk [vmem:[%s257 + $0x1c] sm:$0xf] %vm1291, %v1234
        %1300 = vst.msk [vmem:[%s257 + $0x20] sm:$0xf] %vm1291, %v1235
        %1301 = vst.msk [vmem:[%s257 + $0x24] sm:$0xf] %vm1291, %v1236
        %1302 = vst.msk [vmem:[%s257 + $0x28] sm:$0xf] %vm1291, %v1237
        %1303 = vst.msk [vmem:[%s257 + $0x2c] sm:$0xf] %vm1291, %v1238
        %1304 = vst.msk [vmem:[%s257 + $0x30] sm:$0xf] %vm1291, %v1239
        %1305 = vst.msk [vmem:[%s257 + $0x34] sm:$0xf] %vm1291, %v1240
        %1306 = vst.msk [vmem:[%s257 + $0x38] sm:$0xf] %vm1291, %v1241
        %1307 = vst.msk [vmem:[%s257 + $0x3c] sm:$0xf] %vm1291, %v1242
        %1308 = vst.msk [vmem:[%s257 + $0x40] sm:$0xf] %vm1291, %v1243
        %1309 = vst.msk [vmem:[%s257 + $0x44] sm:$0xf] %vm1291, %v1244
        %1310 = vst.msk [vmem:[%s257 + $0x48] sm:$0xf] %vm1291, %v1245
        %1311 = vst.msk [vmem:[%s257 + $0x4c] sm:$0xf] %vm1291, %v1246
        %1312 = vst.msk [vmem:[%s257 + $0x50] sm:$0xf] %vm1291, %v1247
        %1313 = vst.msk [vmem:[%s257 + $0x54] sm:$0xf] %vm1291, %v1248
        %1314 = vst.msk [vmem:[%s257 + $0x58] sm:$0xf] %vm1291, %v1249
        %1315 = vst.msk [vmem:[%s257 + $0x5c] sm:$0xf] %vm1291, %v1250
        %1316 = vst.msk [vmem:[%s257 + $0x60] sm:$0xf] %vm1291, %v1251
        %1317 = vst.msk [vmem:[%s257 + $0x64] sm:$0xf] %vm1291, %v1252
        %1318 = vst.msk [vmem:[%s257 + $0x68] sm:$0xf] %vm1291, %v1253
        %1319 = vst.msk [vmem:[%s257 + $0x6c] sm:$0xf] %vm1291, %v1254
        %1320 = vst.msk [vmem:[%s257 + $0x70] sm:$0xf] %vm1291, %v1255
        %1321 = vst.msk [vmem:[%s257 + $0x74] sm:$0xf] %vm1291, %v1256
        %1322 = vst.msk [vmem:[%s257 + $0x78] sm:$0xf] %vm1291, %v1257
        %1323 = vst.msk [vmem:[%s257 + $0x7c] sm:$0xf] %vm1291, %v1258
        %1324 = vst.msk [vmem:[%s257 + $0x80] sm:$0xf] %vm1291, %v1259
        %1325 = vst.msk [vmem:[%s257 + $0x84] sm:$0xf] %vm1291, %v1260
        %1326 = vst.msk [vmem:[%s257 + $0x88] sm:$0xf] %vm1291, %v1261
        %1327 = vst.msk [vmem:[%s257 + $0x8c] sm:$0xf] %vm1291, %v1262
        %1328 = vst.msk [vmem:[%s257 + $0x90] sm:$0xf] %vm1291, %v1263
        %1329 = vst.msk [vmem:[%s257 + $0x94] sm:$0xf] %vm1291, %v1264
        %1330 = vst.msk [vmem:[%s257 + $0x98] sm:$0xf] %vm1291, %v1265
        %1331 = vst.msk [vmem:[%s257 + $0x9c] sm:$0xf] %vm1291, %v1266
        %1332 = vst.msk [vmem:[%s257 + $0xa0] sm:$0xf] %vm1291, %v1267
        %1333 = vst.msk [vmem:[%s257 + $0xa4] sm:$0xf] %vm1291, %v1268
        %1334 = vst.msk [vmem:[%s257 + $0xa8] sm:$0xf] %vm1291, %v1269
        %1335 = vst.msk [vmem:[%s257 + $0xac] sm:$0xf] %vm1291, %v1270
        %1336 = vst.msk [vmem:[%s257 + $0xb0] sm:$0xf] %vm1291, %v1271
        %1337 = vst.msk [vmem:[%s257 + $0xb4] sm:$0xf] %vm1291, %v1272
        %1338 = vst.msk [vmem:[%s257 + $0xb8] sm:$0xf] %vm1291, %v1273
        %1339 = vst.msk [vmem:[%s257 + $0xbc] sm:$0xf] %vm1291, %v1274
        %1340 = vst.msk [vmem:[%s257 + $0xc0] sm:$0xf] %vm1291, %v1275
        %1341 = vst.msk [vmem:[%s257 + $0xc4] sm:$0xf] %vm1291, %v1276
        %1342 = vst.msk [vmem:[%s257 + $0xc8] sm:$0xf] %vm1291, %v1277
        %1343 = vst.msk [vmem:[%s257 + $0xcc] sm:$0xf] %vm1291, %v1278
        %1344 = vst.msk [vmem:[%s257 + $0xd0] sm:$0xf] %vm1291, %v1279
        %1345 = vst.msk [vmem:[%s257 + $0xd4] sm:$0xf] %vm1291, %v1280
        %1346 = vst.msk [vmem:[%s257 + $0xd8] sm:$0xf] %vm1291, %v1281
        %1347 = vst.msk [vmem:[%s257 + $0xdc] sm:$0xf] %vm1291, %v1282
        %1348 = vst.msk [vmem:[%s257 + $0xe0] sm:$0xf] %vm1291, %v1283
        %1349 = vst.msk [vmem:[%s257 + $0xe4] sm:$0xf] %vm1291, %v1284
        %1350 = vst.msk [vmem:[%s257 + $0xe8] sm:$0xf] %vm1291, %v1285
        %1351 = vst.msk [vmem:[%s257 + $0xec] sm:$0xf] %vm1291, %v1286
        %1352 = vst.msk [vmem:[%s257 + $0xf0] sm:$0xf] %vm1291, %v1287
        %1353 = vst.msk [vmem:[%s257 + $0xf4] sm:$0xf] %vm1291, %v1288
        %1354 = vst.msk [vmem:[%s257 + $0xf8] sm:$0xf] %vm1291, %v1289
        %1355 = vst.msk [vmem:[%s257 + $0xfc] sm:$0xf] %vm1291, %v1290
      $region40: #{matmul_bias_act.1} parent=31 // pred_fallthru
        _
      %s1356 = smul.u32 64, %s19
      %p1357 = scmp.lt.s32.totalorder %s1356, 1023
      %s1358 = scalar_select %p1357, %s1356, 1023
      %p1359 = scmp.lt.s32.totalorder %s20, 0
      %s1360 = scalar_select %p1359, %s20, 0
      %s1361 = sadd.s32 %s1360, %s1358
      %s1362 = smul.addr %s1361, 4
      %s1363 = scalar_lea.vmem %s3, %s1362
      // Predicated region
      $region41: #{matmul_bias_act.1} parent=31 // pred_check
        %p1364 = pneg %p135
      $region42: #{matmul_bias_act.1} parent=31 // pred_check_branch
        %1366 = sbr.rel (%p1364) target = $region44
      $region43: #{matmul_bias_act.1} parent=31 // pred_region
        %s1367 = smul.u32 64, %s19
      $region44: #{matmul_bias_act.1} parent=31 // pred_fallthru
        _
    $region32: #{matmul_bias_act.1} parent=5 // pred_fallthru
      _
    %p1368 = scmp.le.s32.totalorder 2, %s9
    // Predicated region
    $region45: #{matmul_bias_act.1} parent=5 // pred_check
      %p1369 = pneg %p1368
    $region46: #{matmul_bias_act.1} parent=5 // pred_check_branch
      %1371 = sbr.rel (%p1369) target = $region48
    $region47: #{matmul_bias_act.1} parent=5 // pred_region
      %s1372 = ssub.s32 %s9, 2
      // Predicated region
      $region49: #{matmul_bias_act.1} parent=47 // pred_check
        %p1373 = pneg %p141
      $region50: #{matmul_bias_act.1} parent=47 // pred_check_branch
        %1375 = sbr.rel (%p1373) target = $region52
      $region51: #{matmul_bias_act.1} parent=47 // pred_region
        %s1376 = smul.u32 64, %s22
        %p1377 = scmp.lt.s32.totalorder %s1376, 1023
        %s1378 = scalar_select %p1377, %s1376, 1023
        %p1379 = scmp.lt.s32.totalorder %s23, 0
        %s1380 = scalar_select %p1379, %s23, 0
        %s1381 = sadd.s32 %s1380, %s1378
        %s1382 = smul.addr %s1381, 4
        %s1383 = scalar_lea.vmem %s3, %s1382
      $region52: #{matmul_bias_act.1} parent=47 // pred_fallthru
        _
    $region48: #{matmul_bias_act.1} parent=5 // pred_fallthru
      _
  $region6: #{matmul_bias_act.1} parent=0 // loop_footer
    %s13 = sadd.s32 1, %s9
  $region7: #{matmul_bias_act.1} parent=0 // loop_footer_branch
    %8 = sbr.rel target = $region3
  $region8: #{matmul_bias_act.1} parent=0 // loop_exit
    _

</llo_original>
